<compile_context>
chip_gen: v6e
topology: v6e:2x2x1
jax: 0.10.0
libtpu: 0.0.40
codegen_flags: <defaults>
</compile_context>

<pallas_src>
import jax
import jax.numpy as jnp
from jax.experimental import pallas as pl
from jax.experimental.pallas import tpu as pltpu
from functools import reduce


def _round_up(x, m):
    return ((x + m - 1) // m) * m


def realnvp_actor_kernel(
    x_ref, zl_ref, zr_ref,
    w1_ref, b1_ref, w2_ref, b2_ref, we_ref, be_ref,
    c1_s_pe_ref, c1_s_pc_ref, c1_s_pb_ref, c1_s_w_ref, c1_s_b_ref,
    c1_t_pe_ref, c1_t_pc_ref, c1_t_pb_ref, c1_t_w_ref, c1_t_b_ref,
    c2_s_pe_ref, c2_s_pc_ref, c2_s_pb_ref, c2_s_w_ref, c2_s_b_ref,
    c2_t_pe_ref, c2_t_pc_ref, c2_t_pb_ref, c2_t_w_ref, c2_t_b_ref,
    out_ref,
):
    """One batch tile of the full RealNVPActor forward (action path)."""

    def mm(a, w_ref):
        # bf16 operands on the MXU, f32 accumulation; bias/ReLU/exp stay f32 (VPU/EUP).
        return jnp.dot(a.astype(jnp.bfloat16),
                       w_ref[...].astype(jnp.bfloat16),
                       preferred_element_type=jnp.float32)

    # feature_net: Linear -> ReLU -> Linear -> ReLU
    x = x_ref[...]
    h = jnp.maximum(mm(x, w1_ref) + b1_ref[...], 0.0)
    h = jnp.maximum(mm(h, w2_ref) + b2_ref[...], 0.0)
    # embedding_net: Linear (no activation)
    emb = mm(h, we_ref) + be_ref[...]

    def coupling(z_copy, z_transform,
                 s_pe, s_pc, s_pb, s_w, s_b,
                 t_pe, t_pc, t_pb, t_w, t_b):
        # prenet input is cat(emb, z_copy); computed as two matmuls on the
        # row-split prenet weight (emb-part + copy-part) -> no lane concat.
        hs = jnp.maximum(mm(emb, s_pe) + mm(z_copy, s_pc) + s_pb[...], 0.0)
        s = mm(hs, s_w) + s_b[...]
        ht = jnp.maximum(mm(emb, t_pe) + mm(z_copy, t_pc) + t_pb[...], 0.0)
        t = mm(ht, t_w) + t_b[...]
        return t + z_transform * jnp.exp(s)

    zl = zl_ref[...]   # z[:, :A//2]
    zr = zr_ref[...]   # z[:, A//2:]

    # coupling1, parity "odd": copy = left half, transform = right half
    zr = coupling(zl, zr,
                  c1_s_pe_ref, c1_s_pc_ref, c1_s_pb_ref, c1_s_w_ref, c1_s_b_ref,
                  c1_t_pe_ref, c1_t_pc_ref, c1_t_pb_ref, c1_t_w_ref, c1_t_b_ref)
    # coupling2, parity "even": copy = (updated) right half, transform = left half
    zl = coupling(zr, zl,
                  c2_s_pe_ref, c2_s_pc_ref, c2_s_pb_ref, c2_s_w_ref, c2_s_b_ref,
                  c2_t_pe_ref, c2_t_pc_ref, c2_t_pb_ref, c2_t_w_ref, c2_t_b_ref)

    # SquashingLayer(Sigmoid): action = sigmoid(z). Lane-dense padded store:
    # the HBM block is (TB, 128); the real action occupies the first A lanes.
    cl = zl.shape[1]
    cr = zr.shape[1]
    out_ref[...] = jnp.zeros_like(out_ref)
    out_ref[:, :cl] = 1.0 / (1.0 + jnp.exp(-zl))
    out_ref[:, cl:cl + cr] = 1.0 / (1.0 + jnp.exp(-zr))


def realnvp_actor_forward(observation, z, params):
    """observation: (B, C, H, W) float32; z: (B, action_size) standard-normal noise."""
    B = observation.shape[0]
    A = z.shape[1]
    cl = A // 2          # coupling1 ("odd") copy size == left-half width
    cr = A - A // 2      # coupling2 ("even") copy size == right-half width

    x = observation.reshape(B, -1).astype(jnp.float32)   # view(B, -1)
    D = x.shape[1]
    zl = z[:, :cl].astype(jnp.float32)
    zr = z[:, cl:].astype(jnp.float32)

    # Batch tile: multiple of 8 (f32 sublane); 256 for large B (fills MXU M dim).
    TB = 256 if B >= 256 else _round_up(B, 8)
    B_pad = _round_up(B, TB)
    if B_pad != B:
        pad = ((0, B_pad - B), (0, 0))
        x = jnp.pad(x, pad)
        zl = jnp.pad(zl, pad)
        zr = jnp.pad(zr, pad)

    # Big feature/embedding weights stored bf16 (halves HBM/VMEM traffic);
    # tiny coupling weights and all biases stay f32 (cast in-register for the MXU).
    bf16 = jnp.bfloat16
    c1p, c2p = params["coupling1"], params["coupling2"]
    weights = (
        params["w1"].astype(bf16), params["b1"],
        params["w2"].astype(bf16), params["b2"],
        params["we"].astype(bf16), params["be"],
        c1p["s_pe"], c1p["s_pc"], c1p["s_pb"], c1p["s_w"], c1p["s_b"],
        c1p["t_pe"], c1p["t_pc"], c1p["t_pb"], c1p["t_w"], c1p["t_b"],
        c2p["s_pe"], c2p["s_pc"], c2p["s_pb"], c2p["s_w"], c2p["s_b"],
        c2p["t_pe"], c2p["t_pc"], c2p["t_pb"], c2p["t_w"], c2p["t_b"],
    )

    OUT_PAD = _round_up(A, 128)
    grid = (B_pad // TB,)

    batch_specs = [
        pl.BlockSpec((TB, D), lambda i: (i, 0)),
        pl.BlockSpec((TB, cl), lambda i: (i, 0)),
        pl.BlockSpec((TB, cr), lambda i: (i, 0)),
    ]
    # Weights/biases are grid-invariant (constant index_map -> fetched once).
    weight_specs = [pl.BlockSpec(w.shape, lambda i: (0, 0)) for w in weights]

    out = pl.pallas_call(
        realnvp_actor_kernel,
        out_shape=jax.ShapeDtypeStruct((B_pad, OUT_PAD), jnp.float32),
        grid=grid,
        in_specs=batch_specs + weight_specs,
        out_specs=pl.BlockSpec((TB, OUT_PAD), lambda i: (i, 0)),
        compiler_params=pltpu.CompilerParams(
            dimension_semantics=("parallel",)),   # v7x: shard batch tiles over 2 TCs
    )(x, zl, zr, *weights)

    return out[:B, :A]


def init_params(key, state_size, hiddens, action_size):
    """Synthetic init mirroring the module's layer shapes.

    feature_net:   Linear(state_size, h1)+ReLU, Linear(h1, h2)+ReLU   (Kaiming)
    embedding_net: Linear(h2, 2*A)                                    (Kaiming)
    coupling{1,2}: scale/translation prenet Linear(2*A + copy, 2*A)+ReLU (Kaiming,
                   stored row-split into emb-part / copy-part) and
                   scale/translation head Linear(2*A, A - copy)       (out_init +-3e-3)
    Biases are small uniforms so the bias path is exercised.
    """
    A = action_size
    E = 2 * A
    h1, h2 = hiddens
    keys = iter(jax.random.split(key, 40))

    def kaiming(shape, fan_in=None):
        fan_in = shape[0] if fan_in is None else fan_in
        return jax.random.normal(next(keys), shape, jnp.float32) * jnp.sqrt(2.0 / fan_in)

    def out_init(shape):
        return jax.random.uniform(next(keys), shape, jnp.float32, -3e-3, 3e-3)

    def bias(n):
        return jax.random.uniform(next(keys), (1, n), jnp.float32, -0.05, 0.05)

    def coupling(copy_size):
        fan_in = E + copy_size
        out_size = A - copy_size
        return {
            "s_pe": kaiming((E, E), fan_in), "s_pc": kaiming((copy_size, E), fan_in),
            "s_pb": bias(E), "s_w": out_init((E, out_size)), "s_b": bias(out_size),
            "t_pe": kaiming((E, E), fan_in), "t_pc": kaiming((copy_size, E), fan_in),
            "t_pb": bias(E), "t_w": out_init((E, out_size)), "t_b": bias(out_size),
        }

    return {
        "w1": kaiming((state_size, h1)), "b1": bias(h1),
        "w2": kaiming((h1, h2)), "b2": bias(h2),
        "we": kaiming((h2, E)), "be": bias(E),
        "coupling1": coupling(A // 2),        # parity "odd"
        "coupling2": coupling(A - A // 2),    # parity "even"
    }


def reference_forward(observation, z, params, matmul_dtype=jnp.float32):
    """Pure-JAX reference of the module's action path.

    matmul_dtype=bfloat16 mirrors the kernel's MXU numerics (f32 accumulation);
    matmul_dtype=float32 gives the straight f32 module semantics.
    """
    def mm(a, w):
        return jnp.dot(a.astype(matmul_dtype), w.astype(matmul_dtype),
                       preferred_element_type=jnp.float32)

    B = observation.shape[0]
    A = z.shape[1]
    x = observation.reshape(B, -1).astype(jnp.float32)
    h = jnp.maximum(mm(x, params["w1"]) + params["b1"], 0.0)
    h = jnp.maximum(mm(h, params["w2"]) + params["b2"], 0.0)
    emb = mm(h, params["we"]) + params["be"]

    def coupling(z_vec, p, parity):
        if parity == "odd":
            c = A // 2
            z_copy, z_tr = z_vec[:, :c], z_vec[:, c:]
        else:
            c = A - A // 2
            z_copy, z_tr = z_vec[:, A - c:], z_vec[:, :A - c]
        u = jnp.concatenate([emb, z_copy], axis=1)
        w_sp = jnp.concatenate([p["s_pe"], p["s_pc"]], axis=0)
        w_tp = jnp.concatenate([p["t_pe"], p["t_pc"]], axis=0)
        hs = jnp.maximum(mm(u, w_sp) + p["s_pb"], 0.0)
        s = mm(hs, p["s_w"]) + p["s_b"]
        ht = jnp.maximum(mm(u, w_tp) + p["t_pb"], 0.0)
        t = mm(ht, p["t_w"]) + p["t_b"]
        out_tr = t + z_tr * jnp.exp(s)
        if parity == "odd":
            return jnp.concatenate([z_copy, out_tr], axis=1)
        return jnp.concatenate([out_tr, z_copy], axis=1)

    zz = coupling(z.astype(jnp.float32), params["coupling1"], "odd")
    zz = coupling(zz, params["coupling2"], "even")
    return 1.0 / (1.0 + jnp.exp(-zz))


if __name__ == "__main__":
    # Small shapes consistent with the module: state_shape=(4,16,16), hiddens=[32,32]
    B = 2
    state_shape = (4, 16, 16)
    hiddens = [32, 32]
    action_size = 6
    state_size = reduce(lambda a, b: a * b, state_shape)

    key = jax.random.PRNGKey(0)
    k_obs, k_par, k_z = jax.random.split(key, 3)
    observation = jax.random.normal(k_obs, (B,) + state_shape, jnp.float32)
    params = init_params(k_par, state_size, hiddens, action_size)
    # z = normal_sample(mu=0, sigma=1): standard normal noise, shared with the reference.
    z = jax.random.normal(k_z, (B, action_size), jnp.float32)

    action = realnvp_actor_forward(observation, z, params)
    action = jax.block_until_ready(action)
    assert action.shape == (B, action_size)

    # Matched-numerics check (reference mimics the kernel's bf16 MXU matmuls).
    ref_bf16 = reference_forward(observation, z, params, matmul_dtype=jnp.bfloat16)
    assert jnp.allclose(action, ref_bf16, atol=5e-4, rtol=5e-4)

    # Full-f32 module-semantics check (loose tolerance for bf16 matmul operands).
    ref_f32 = reference_forward(observation, z, params, matmul_dtype=jnp.float32)
    assert jnp.allclose(action, ref_f32, atol=2e-2, rtol=2e-2)

    print("KERNEL_OK")
</pallas_src>

<mosaic_0001>
module attributes {stable_mosaic.version = 11 : i64} {
  func.func @realnvp_actor_kernel(%arg0: i32, %arg1: memref<8x1024xf32, #tpu.memory_space<vmem>>, %arg2: memref<8x3xf32, #tpu.memory_space<vmem>>, %arg3: memref<8x3xf32, #tpu.memory_space<vmem>>, %arg4: memref<1024x32xbf16, #tpu.memory_space<vmem>>, %arg5: memref<1x32xf32, #tpu.memory_space<vmem>>, %arg6: memref<32x32xbf16, #tpu.memory_space<vmem>>, %arg7: memref<1x32xf32, #tpu.memory_space<vmem>>, %arg8: memref<32x12xbf16, #tpu.memory_space<vmem>>, %arg9: memref<1x12xf32, #tpu.memory_space<vmem>>, %arg10: memref<12x12xf32, #tpu.memory_space<vmem>>, %arg11: memref<3x12xf32, #tpu.memory_space<vmem>>, %arg12: memref<1x12xf32, #tpu.memory_space<vmem>>, %arg13: memref<12x3xf32, #tpu.memory_space<vmem>>, %arg14: memref<1x3xf32, #tpu.memory_space<vmem>>, %arg15: memref<12x12xf32, #tpu.memory_space<vmem>>, %arg16: memref<3x12xf32, #tpu.memory_space<vmem>>, %arg17: memref<1x12xf32, #tpu.memory_space<vmem>>, %arg18: memref<12x3xf32, #tpu.memory_space<vmem>>, %arg19: memref<1x3xf32, #tpu.memory_space<vmem>>, %arg20: memref<12x12xf32, #tpu.memory_space<vmem>>, %arg21: memref<3x12xf32, #tpu.memory_space<vmem>>, %arg22: memref<1x12xf32, #tpu.memory_space<vmem>>, %arg23: memref<12x3xf32, #tpu.memory_space<vmem>>, %arg24: memref<1x3xf32, #tpu.memory_space<vmem>>, %arg25: memref<12x12xf32, #tpu.memory_space<vmem>>, %arg26: memref<3x12xf32, #tpu.memory_space<vmem>>, %arg27: memref<1x12xf32, #tpu.memory_space<vmem>>, %arg28: memref<12x3xf32, #tpu.memory_space<vmem>>, %arg29: memref<1x3xf32, #tpu.memory_space<vmem>>, %arg30: memref<8x128xf32, #tpu.memory_space<vmem>>) attributes {dimension_semantics = [#tpu.dimension_semantics<parallel>], iteration_bounds = array<i64: 1>, scalar_prefetch = 0 : i64, scratch_operands = 0 : i64, tpu.core_type = #tpu.core_type<tc>, window_params = [{transform_indices = @transform_0, window_bounds = array<i64: 8, 1024>}, {transform_indices = @transform_1, window_bounds = array<i64: 8, 3>}, {transform_indices = @transform_2, window_bounds = array<i64: 8, 3>}, {pipeline_mode = #tpu.pipeline_mode<synchronous>, transform_indices = @transform_3, window_bounds = array<i64: 1024, 32>}, {pipeline_mode = #tpu.pipeline_mode<synchronous>, transform_indices = @transform_4, window_bounds = array<i64: 1, 32>}, {pipeline_mode = #tpu.pipeline_mode<synchronous>, transform_indices = @transform_5, window_bounds = array<i64: 32, 32>}, {pipeline_mode = #tpu.pipeline_mode<synchronous>, transform_indices = @transform_6, window_bounds = array<i64: 1, 32>}, {pipeline_mode = #tpu.pipeline_mode<synchronous>, transform_indices = @transform_7, window_bounds = array<i64: 32, 12>}, {pipeline_mode = #tpu.pipeline_mode<synchronous>, transform_indices = @transform_8, window_bounds = array<i64: 1, 12>}, {pipeline_mode = #tpu.pipeline_mode<synchronous>, transform_indices = @transform_9, window_bounds = array<i64: 12, 12>}, {pipeline_mode = #tpu.pipeline_mode<synchronous>, transform_indices = @transform_10, window_bounds = array<i64: 3, 12>}, {pipeline_mode = #tpu.pipeline_mode<synchronous>, transform_indices = @transform_11, window_bounds = array<i64: 1, 12>}, {pipeline_mode = #tpu.pipeline_mode<synchronous>, transform_indices = @transform_12, window_bounds = array<i64: 12, 3>}, {pipeline_mode = #tpu.pipeline_mode<synchronous>, transform_indices = @transform_13, window_bounds = array<i64: 1, 3>}, {pipeline_mode = #tpu.pipeline_mode<synchronous>, transform_indices = @transform_14, window_bounds = array<i64: 12, 12>}, {pipeline_mode = #tpu.pipeline_mode<synchronous>, transform_indices = @transform_15, window_bounds = array<i64: 3, 12>}, {pipeline_mode = #tpu.pipeline_mode<synchronous>, transform_indices = @transform_16, window_bounds = array<i64: 1, 12>}, {pipeline_mode = #tpu.pipeline_mode<synchronous>, transform_indices = @transform_17, window_bounds = array<i64: 12, 3>}, {pipeline_mode = #tpu.pipeline_mode<synchronous>, transform_indices = @transform_18, window_bounds = array<i64: 1, 3>}, {pipeline_mode = #tpu.pipeline_mode<synchronous>, transform_indices = @transform_19, window_bounds = array<i64: 12, 12>}, {pipeline_mode = #tpu.pipeline_mode<synchronous>, transform_indices = @transform_20, window_bounds = array<i64: 3, 12>}, {pipeline_mode = #tpu.pipeline_mode<synchronous>, transform_indices = @transform_21, window_bounds = array<i64: 1, 12>}, {pipeline_mode = #tpu.pipeline_mode<synchronous>, transform_indices = @transform_22, window_bounds = array<i64: 12, 3>}, {pipeline_mode = #tpu.pipeline_mode<synchronous>, transform_indices = @transform_23, window_bounds = array<i64: 1, 3>}, {pipeline_mode = #tpu.pipeline_mode<synchronous>, transform_indices = @transform_24, window_bounds = array<i64: 12, 12>}, {pipeline_mode = #tpu.pipeline_mode<synchronous>, transform_indices = @transform_25, window_bounds = array<i64: 3, 12>}, {pipeline_mode = #tpu.pipeline_mode<synchronous>, transform_indices = @transform_26, window_bounds = array<i64: 1, 12>}, {pipeline_mode = #tpu.pipeline_mode<synchronous>, transform_indices = @transform_27, window_bounds = array<i64: 12, 3>}, {pipeline_mode = #tpu.pipeline_mode<synchronous>, transform_indices = @transform_28, window_bounds = array<i64: 1, 3>}, {transform_indices = @transform_29, window_bounds = array<i64: 8, 128>}]} {
    %c0 = arith.constant 0 : index
    %c0_0 = arith.constant 0 : index
    %0 = vector.load %arg1[%c0, %c0_0] : memref<8x1024xf32, #tpu.memory_space<vmem>>, vector<8x1024xf32>
    %1 = arith.truncf %0 : vector<8x1024xf32> to vector<8x1024xbf16>
    %c0_1 = arith.constant 0 : index
    %c0_2 = arith.constant 0 : index
    %2 = vector.load %arg4[%c0_1, %c0_2] : memref<1024x32xbf16, #tpu.memory_space<vmem>>, vector<1024x32xbf16>
    %cst = arith.constant dense<0.000000e+00> : vector<8x32xf32>
    %3 = tpu.matmul %1, %2, %cst {dimension_numbers = #tpu.dot_dimension_numbers<[1], [0], [0], [1], [0, 0, 1, 1], [], []>} : vector<8x1024xbf16>, vector<1024x32xbf16>, vector<8x32xf32> -> vector<8x32xf32>
    %c0_3 = arith.constant 0 : index
    %c0_4 = arith.constant 0 : index
    %4 = vector.load %arg5[%c0_3, %c0_4] : memref<1x32xf32, #tpu.memory_space<vmem>>, vector<1x32xf32>
    %5 = vector.broadcast %4 : vector<1x32xf32> to vector<8x32xf32>
    %6 = arith.addf %3, %5 : vector<8x32xf32>
    %cst_5 = arith.constant 0.000000e+00 : f32
    %7 = vector.broadcast %cst_5 : f32 to vector<8x32xf32>
    %8 = arith.maximumf %6, %7 : vector<8x32xf32>
    %9 = arith.truncf %8 : vector<8x32xf32> to vector<8x32xbf16>
    %c0_6 = arith.constant 0 : index
    %c0_7 = arith.constant 0 : index
    %10 = vector.load %arg6[%c0_6, %c0_7] : memref<32x32xbf16, #tpu.memory_space<vmem>>, vector<32x32xbf16>
    %cst_8 = arith.constant dense<0.000000e+00> : vector<8x32xf32>
    %11 = tpu.matmul %9, %10, %cst_8 {dimension_numbers = #tpu.dot_dimension_numbers<[1], [0], [0], [1], [0, 0, 1, 1], [], []>} : vector<8x32xbf16>, vector<32x32xbf16>, vector<8x32xf32> -> vector<8x32xf32>
    %c0_9 = arith.constant 0 : index
    %c0_10 = arith.constant 0 : index
    %12 = vector.load %arg7[%c0_9, %c0_10] : memref<1x32xf32, #tpu.memory_space<vmem>>, vector<1x32xf32>
    %13 = vector.broadcast %12 : vector<1x32xf32> to vector<8x32xf32>
    %14 = arith.addf %11, %13 : vector<8x32xf32>
    %cst_11 = arith.constant 0.000000e+00 : f32
    %15 = vector.broadcast %cst_11 : f32 to vector<8x32xf32>
    %16 = arith.maximumf %14, %15 : vector<8x32xf32>
    %17 = arith.truncf %16 : vector<8x32xf32> to vector<8x32xbf16>
    %c0_12 = arith.constant 0 : index
    %c0_13 = arith.constant 0 : index
    %18 = vector.load %arg8[%c0_12, %c0_13] : memref<32x12xbf16, #tpu.memory_space<vmem>>, vector<32x12xbf16>
    %cst_14 = arith.constant dense<0.000000e+00> : vector<8x12xf32>
    %19 = tpu.matmul %17, %18, %cst_14 {dimension_numbers = #tpu.dot_dimension_numbers<[1], [0], [0], [1], [0, 0, 1, 1], [], []>} : vector<8x32xbf16>, vector<32x12xbf16>, vector<8x12xf32> -> vector<8x12xf32>
    %c0_15 = arith.constant 0 : index
    %c0_16 = arith.constant 0 : index
    %20 = vector.load %arg9[%c0_15, %c0_16] : memref<1x12xf32, #tpu.memory_space<vmem>>, vector<1x12xf32>
    %21 = vector.broadcast %20 : vector<1x12xf32> to vector<8x12xf32>
    %22 = arith.addf %19, %21 : vector<8x12xf32>
    %c0_17 = arith.constant 0 : index
    %c0_18 = arith.constant 0 : index
    %23 = vector.load %arg2[%c0_17, %c0_18] : memref<8x3xf32, #tpu.memory_space<vmem>>, vector<8x3xf32>
    %c0_19 = arith.constant 0 : index
    %c0_20 = arith.constant 0 : index
    %24 = vector.load %arg3[%c0_19, %c0_20] : memref<8x3xf32, #tpu.memory_space<vmem>>, vector<8x3xf32>
    %25 = arith.truncf %22 : vector<8x12xf32> to vector<8x12xbf16>
    %c0_21 = arith.constant 0 : index
    %c0_22 = arith.constant 0 : index
    %26 = vector.load %arg10[%c0_21, %c0_22] : memref<12x12xf32, #tpu.memory_space<vmem>>, vector<12x12xf32>
    %27 = arith.truncf %26 : vector<12x12xf32> to vector<12x12xbf16>
    %cst_23 = arith.constant dense<0.000000e+00> : vector<8x12xf32>
    %28 = tpu.matmul %25, %27, %cst_23 {dimension_numbers = #tpu.dot_dimension_numbers<[1], [0], [0], [1], [0, 0, 1, 1], [], []>} : vector<8x12xbf16>, vector<12x12xbf16>, vector<8x12xf32> -> vector<8x12xf32>
    %29 = arith.truncf %23 : vector<8x3xf32> to vector<8x3xbf16>
    %c0_24 = arith.constant 0 : index
    %c0_25 = arith.constant 0 : index
    %30 = vector.load %arg11[%c0_24, %c0_25] : memref<3x12xf32, #tpu.memory_space<vmem>>, vector<3x12xf32>
    %31 = arith.truncf %30 : vector<3x12xf32> to vector<3x12xbf16>
    %cst_26 = arith.constant dense<0.000000e+00> : vector<8x12xf32>
    %32 = tpu.matmul %29, %31, %cst_26 {dimension_numbers = #tpu.dot_dimension_numbers<[1], [0], [0], [1], [0, 0, 1, 1], [], []>} : vector<8x3xbf16>, vector<3x12xbf16>, vector<8x12xf32> -> vector<8x12xf32>
    %33 = arith.addf %28, %32 : vector<8x12xf32>
    %c0_27 = arith.constant 0 : index
    %c0_28 = arith.constant 0 : index
    %34 = vector.load %arg12[%c0_27, %c0_28] : memref<1x12xf32, #tpu.memory_space<vmem>>, vector<1x12xf32>
    %35 = vector.broadcast %34 : vector<1x12xf32> to vector<8x12xf32>
    %36 = arith.addf %33, %35 : vector<8x12xf32>
    %cst_29 = arith.constant 0.000000e+00 : f32
    %37 = vector.broadcast %cst_29 : f32 to vector<8x12xf32>
    %38 = arith.maximumf %36, %37 : vector<8x12xf32>
    %39 = arith.truncf %38 : vector<8x12xf32> to vector<8x12xbf16>
    %c0_30 = arith.constant 0 : index
    %c0_31 = arith.constant 0 : index
    %40 = vector.load %arg13[%c0_30, %c0_31] : memref<12x3xf32, #tpu.memory_space<vmem>>, vector<12x3xf32>
    %41 = arith.truncf %40 : vector<12x3xf32> to vector<12x3xbf16>
    %cst_32 = arith.constant dense<0.000000e+00> : vector<8x3xf32>
    %42 = tpu.matmul %39, %41, %cst_32 {dimension_numbers = #tpu.dot_dimension_numbers<[1], [0], [0], [1], [0, 0, 1, 1], [], []>} : vector<8x12xbf16>, vector<12x3xbf16>, vector<8x3xf32> -> vector<8x3xf32>
    %c0_33 = arith.constant 0 : index
    %c0_34 = arith.constant 0 : index
    %43 = vector.load %arg14[%c0_33, %c0_34] : memref<1x3xf32, #tpu.memory_space<vmem>>, vector<1x3xf32>
    %44 = vector.broadcast %43 : vector<1x3xf32> to vector<8x3xf32>
    %45 = arith.addf %42, %44 : vector<8x3xf32>
    %46 = arith.truncf %22 : vector<8x12xf32> to vector<8x12xbf16>
    %c0_35 = arith.constant 0 : index
    %c0_36 = arith.constant 0 : index
    %47 = vector.load %arg15[%c0_35, %c0_36] : memref<12x12xf32, #tpu.memory_space<vmem>>, vector<12x12xf32>
    %48 = arith.truncf %47 : vector<12x12xf32> to vector<12x12xbf16>
    %cst_37 = arith.constant dense<0.000000e+00> : vector<8x12xf32>
    %49 = tpu.matmul %46, %48, %cst_37 {dimension_numbers = #tpu.dot_dimension_numbers<[1], [0], [0], [1], [0, 0, 1, 1], [], []>} : vector<8x12xbf16>, vector<12x12xbf16>, vector<8x12xf32> -> vector<8x12xf32>
    %50 = arith.truncf %23 : vector<8x3xf32> to vector<8x3xbf16>
    %c0_38 = arith.constant 0 : index
    %c0_39 = arith.constant 0 : index
    %51 = vector.load %arg16[%c0_38, %c0_39] : memref<3x12xf32, #tpu.memory_space<vmem>>, vector<3x12xf32>
    %52 = arith.truncf %51 : vector<3x12xf32> to vector<3x12xbf16>
    %cst_40 = arith.constant dense<0.000000e+00> : vector<8x12xf32>
    %53 = tpu.matmul %50, %52, %cst_40 {dimension_numbers = #tpu.dot_dimension_numbers<[1], [0], [0], [1], [0, 0, 1, 1], [], []>} : vector<8x3xbf16>, vector<3x12xbf16>, vector<8x12xf32> -> vector<8x12xf32>
    %54 = arith.addf %49, %53 : vector<8x12xf32>
    %c0_41 = arith.constant 0 : index
    %c0_42 = arith.constant 0 : index
    %55 = vector.load %arg17[%c0_41, %c0_42] : memref<1x12xf32, #tpu.memory_space<vmem>>, vector<1x12xf32>
    %56 = vector.broadcast %55 : vector<1x12xf32> to vector<8x12xf32>
    %57 = arith.addf %54, %56 : vector<8x12xf32>
    %cst_43 = arith.constant 0.000000e+00 : f32
    %58 = vector.broadcast %cst_43 : f32 to vector<8x12xf32>
    %59 = arith.maximumf %57, %58 : vector<8x12xf32>
    %60 = arith.truncf %59 : vector<8x12xf32> to vector<8x12xbf16>
    %c0_44 = arith.constant 0 : index
    %c0_45 = arith.constant 0 : index
    %61 = vector.load %arg18[%c0_44, %c0_45] : memref<12x3xf32, #tpu.memory_space<vmem>>, vector<12x3xf32>
    %62 = arith.truncf %61 : vector<12x3xf32> to vector<12x3xbf16>
    %cst_46 = arith.constant dense<0.000000e+00> : vector<8x3xf32>
    %63 = tpu.matmul %60, %62, %cst_46 {dimension_numbers = #tpu.dot_dimension_numbers<[1], [0], [0], [1], [0, 0, 1, 1], [], []>} : vector<8x12xbf16>, vector<12x3xbf16>, vector<8x3xf32> -> vector<8x3xf32>
    %c0_47 = arith.constant 0 : index
    %c0_48 = arith.constant 0 : index
    %64 = vector.load %arg19[%c0_47, %c0_48] : memref<1x3xf32, #tpu.memory_space<vmem>>, vector<1x3xf32>
    %65 = vector.broadcast %64 : vector<1x3xf32> to vector<8x3xf32>
    %66 = arith.addf %63, %65 : vector<8x3xf32>
    %67 = math.exp %45 : vector<8x3xf32>
    %68 = arith.mulf %24, %67 : vector<8x3xf32>
    %69 = arith.addf %66, %68 : vector<8x3xf32>
    %70 = arith.truncf %22 : vector<8x12xf32> to vector<8x12xbf16>
    %c0_49 = arith.constant 0 : index
    %c0_50 = arith.constant 0 : index
    %71 = vector.load %arg20[%c0_49, %c0_50] : memref<12x12xf32, #tpu.memory_space<vmem>>, vector<12x12xf32>
    %72 = arith.truncf %71 : vector<12x12xf32> to vector<12x12xbf16>
    %cst_51 = arith.constant dense<0.000000e+00> : vector<8x12xf32>
    %73 = tpu.matmul %70, %72, %cst_51 {dimension_numbers = #tpu.dot_dimension_numbers<[1], [0], [0], [1], [0, 0, 1, 1], [], []>} : vector<8x12xbf16>, vector<12x12xbf16>, vector<8x12xf32> -> vector<8x12xf32>
    %74 = arith.truncf %69 : vector<8x3xf32> to vector<8x3xbf16>
    %c0_52 = arith.constant 0 : index
    %c0_53 = arith.constant 0 : index
    %75 = vector.load %arg21[%c0_52, %c0_53] : memref<3x12xf32, #tpu.memory_space<vmem>>, vector<3x12xf32>
    %76 = arith.truncf %75 : vector<3x12xf32> to vector<3x12xbf16>
    %cst_54 = arith.constant dense<0.000000e+00> : vector<8x12xf32>
    %77 = tpu.matmul %74, %76, %cst_54 {dimension_numbers = #tpu.dot_dimension_numbers<[1], [0], [0], [1], [0, 0, 1, 1], [], []>} : vector<8x3xbf16>, vector<3x12xbf16>, vector<8x12xf32> -> vector<8x12xf32>
    %78 = arith.addf %73, %77 : vector<8x12xf32>
    %c0_55 = arith.constant 0 : index
    %c0_56 = arith.constant 0 : index
    %79 = vector.load %arg22[%c0_55, %c0_56] : memref<1x12xf32, #tpu.memory_space<vmem>>, vector<1x12xf32>
    %80 = vector.broadcast %79 : vector<1x12xf32> to vector<8x12xf32>
    %81 = arith.addf %78, %80 : vector<8x12xf32>
    %cst_57 = arith.constant 0.000000e+00 : f32
    %82 = vector.broadcast %cst_57 : f32 to vector<8x12xf32>
    %83 = arith.maximumf %81, %82 : vector<8x12xf32>
    %84 = arith.truncf %83 : vector<8x12xf32> to vector<8x12xbf16>
    %c0_58 = arith.constant 0 : index
    %c0_59 = arith.constant 0 : index
    %85 = vector.load %arg23[%c0_58, %c0_59] : memref<12x3xf32, #tpu.memory_space<vmem>>, vector<12x3xf32>
    %86 = arith.truncf %85 : vector<12x3xf32> to vector<12x3xbf16>
    %cst_60 = arith.constant dense<0.000000e+00> : vector<8x3xf32>
    %87 = tpu.matmul %84, %86, %cst_60 {dimension_numbers = #tpu.dot_dimension_numbers<[1], [0], [0], [1], [0, 0, 1, 1], [], []>} : vector<8x12xbf16>, vector<12x3xbf16>, vector<8x3xf32> -> vector<8x3xf32>
    %c0_61 = arith.constant 0 : index
    %c0_62 = arith.constant 0 : index
    %88 = vector.load %arg24[%c0_61, %c0_62] : memref<1x3xf32, #tpu.memory_space<vmem>>, vector<1x3xf32>
    %89 = vector.broadcast %88 : vector<1x3xf32> to vector<8x3xf32>
    %90 = arith.addf %87, %89 : vector<8x3xf32>
    %91 = arith.truncf %22 : vector<8x12xf32> to vector<8x12xbf16>
    %c0_63 = arith.constant 0 : index
    %c0_64 = arith.constant 0 : index
    %92 = vector.load %arg25[%c0_63, %c0_64] : memref<12x12xf32, #tpu.memory_space<vmem>>, vector<12x12xf32>
    %93 = arith.truncf %92 : vector<12x12xf32> to vector<12x12xbf16>
    %cst_65 = arith.constant dense<0.000000e+00> : vector<8x12xf32>
    %94 = tpu.matmul %91, %93, %cst_65 {dimension_numbers = #tpu.dot_dimension_numbers<[1], [0], [0], [1], [0, 0, 1, 1], [], []>} : vector<8x12xbf16>, vector<12x12xbf16>, vector<8x12xf32> -> vector<8x12xf32>
    %95 = arith.truncf %69 : vector<8x3xf32> to vector<8x3xbf16>
    %c0_66 = arith.constant 0 : index
    %c0_67 = arith.constant 0 : index
    %96 = vector.load %arg26[%c0_66, %c0_67] : memref<3x12xf32, #tpu.memory_space<vmem>>, vector<3x12xf32>
    %97 = arith.truncf %96 : vector<3x12xf32> to vector<3x12xbf16>
    %cst_68 = arith.constant dense<0.000000e+00> : vector<8x12xf32>
    %98 = tpu.matmul %95, %97, %cst_68 {dimension_numbers = #tpu.dot_dimension_numbers<[1], [0], [0], [1], [0, 0, 1, 1], [], []>} : vector<8x3xbf16>, vector<3x12xbf16>, vector<8x12xf32> -> vector<8x12xf32>
    %99 = arith.addf %94, %98 : vector<8x12xf32>
    %c0_69 = arith.constant 0 : index
    %c0_70 = arith.constant 0 : index
    %100 = vector.load %arg27[%c0_69, %c0_70] : memref<1x12xf32, #tpu.memory_space<vmem>>, vector<1x12xf32>
    %101 = vector.broadcast %100 : vector<1x12xf32> to vector<8x12xf32>
    %102 = arith.addf %99, %101 : vector<8x12xf32>
    %cst_71 = arith.constant 0.000000e+00 : f32
    %103 = vector.broadcast %cst_71 : f32 to vector<8x12xf32>
    %104 = arith.maximumf %102, %103 : vector<8x12xf32>
    %105 = arith.truncf %104 : vector<8x12xf32> to vector<8x12xbf16>
    %c0_72 = arith.constant 0 : index
    %c0_73 = arith.constant 0 : index
    %106 = vector.load %arg28[%c0_72, %c0_73] : memref<12x3xf32, #tpu.memory_space<vmem>>, vector<12x3xf32>
    %107 = arith.truncf %106 : vector<12x3xf32> to vector<12x3xbf16>
    %cst_74 = arith.constant dense<0.000000e+00> : vector<8x3xf32>
    %108 = tpu.matmul %105, %107, %cst_74 {dimension_numbers = #tpu.dot_dimension_numbers<[1], [0], [0], [1], [0, 0, 1, 1], [], []>} : vector<8x12xbf16>, vector<12x3xbf16>, vector<8x3xf32> -> vector<8x3xf32>
    %c0_75 = arith.constant 0 : index
    %c0_76 = arith.constant 0 : index
    %109 = vector.load %arg29[%c0_75, %c0_76] : memref<1x3xf32, #tpu.memory_space<vmem>>, vector<1x3xf32>
    %110 = vector.broadcast %109 : vector<1x3xf32> to vector<8x3xf32>
    %111 = arith.addf %108, %110 : vector<8x3xf32>
    %112 = math.exp %90 : vector<8x3xf32>
    %113 = arith.mulf %23, %112 : vector<8x3xf32>
    %114 = arith.addf %111, %113 : vector<8x3xf32>
    %cst_77 = arith.constant 0.000000e+00 : f32
    %115 = vector.broadcast %cst_77 : f32 to vector<8x128xf32>
    %c0_78 = arith.constant 0 : index
    %c0_79 = arith.constant 0 : index
    %116 = vector.load %arg30[%c0_78, %c0_79] : memref<8x128xf32, #tpu.memory_space<vmem>>, vector<8x128xf32>
    tpu.vector_store %arg30[%c0_78, %c0_79], %115 {strides = array<i32>} : memref<8x128xf32, #tpu.memory_space<vmem>>, vector<8x128xf32>,
    %cst_80 = arith.constant 0.000000e+00 : f32
    %117 = vector.broadcast %cst_80 : f32 to vector<8x3xf32>
    %118 = arith.subf %117, %114 : vector<8x3xf32>
    %119 = math.exp %118 : vector<8x3xf32>
    %cst_81 = arith.constant 1.000000e+00 : f32
    %120 = vector.broadcast %cst_81 : f32 to vector<8x3xf32>
    %121 = arith.addf %120, %119 : vector<8x3xf32>
    %cst_82 = arith.constant 1.000000e+00 : f32
    %122 = vector.broadcast %cst_82 : f32 to vector<8x3xf32>
    %123 = arith.divf %122, %121 : vector<8x3xf32>
    %c0_83 = arith.constant 0 : index
    %c0_84 = arith.constant 0 : index
    %124 = vector.load %arg30[%c0_83, %c0_84] : memref<8x128xf32, #tpu.memory_space<vmem>>, vector<8x3xf32>
    tpu.vector_store %arg30[%c0_83, %c0_84], %123 {strides = array<i32>} : memref<8x128xf32, #tpu.memory_space<vmem>>, vector<8x3xf32>,
    %cst_85 = arith.constant 0.000000e+00 : f32
    %125 = vector.broadcast %cst_85 : f32 to vector<8x3xf32>
    %126 = arith.subf %125, %69 : vector<8x3xf32>
    %127 = math.exp %126 : vector<8x3xf32>
    %cst_86 = arith.constant 1.000000e+00 : f32
    %128 = vector.broadcast %cst_86 : f32 to vector<8x3xf32>
    %129 = arith.addf %128, %127 : vector<8x3xf32>
    %cst_87 = arith.constant 1.000000e+00 : f32
    %130 = vector.broadcast %cst_87 : f32 to vector<8x3xf32>
    %131 = arith.divf %130, %129 : vector<8x3xf32>
    %c0_88 = arith.constant 0 : index
    %c3 = arith.constant 3 : index
    %132 = vector.load %arg30[%c0_88, %c3] : memref<8x128xf32, #tpu.memory_space<vmem>>, vector<8x3xf32>
    tpu.vector_store %arg30[%c0_88, %c3], %131 {strides = array<i32>} : memref<8x128xf32, #tpu.memory_space<vmem>>, vector<8x3xf32>,
    return
  }
  func.func @transform_0(%arg0: i32) -> (i32, i32) {
    %c0_i32 = arith.constant 0 : i32
    %c0_i32_0 = arith.constant 0 : i32
    return %arg0, %c0_i32 : i32, i32
  }
  func.func @transform_1(%arg0: i32) -> (i32, i32) {
    %c0_i32 = arith.constant 0 : i32
    %c0_i32_0 = arith.constant 0 : i32
    return %arg0, %c0_i32 : i32, i32
  }
  func.func @transform_2(%arg0: i32) -> (i32, i32) {
    %c0_i32 = arith.constant 0 : i32
    %c0_i32_0 = arith.constant 0 : i32
    return %arg0, %c0_i32 : i32, i32
  }
  func.func @transform_3(%arg0: i32) -> (i32, i32) {
    %c0_i32 = arith.constant 0 : i32
    %c0_i32_0 = arith.constant 0 : i32
    %c0_i32_1 = arith.constant 0 : i32
    return %c0_i32, %c0_i32_0 : i32, i32
  }
  func.func @transform_4(%arg0: i32) -> (i32, i32) {
    %c0_i32 = arith.constant 0 : i32
    %c0_i32_0 = arith.constant 0 : i32
    %c0_i32_1 = arith.constant 0 : i32
    return %c0_i32, %c0_i32_0 : i32, i32
  }
  func.func @transform_5(%arg0: i32) -> (i32, i32) {
    %c0_i32 = arith.constant 0 : i32
    %c0_i32_0 = arith.constant 0 : i32
    %c0_i32_1 = arith.constant 0 : i32
    return %c0_i32, %c0_i32_0 : i32, i32
  }
  func.func @transform_6(%arg0: i32) -> (i32, i32) {
    %c0_i32 = arith.constant 0 : i32
    %c0_i32_0 = arith.constant 0 : i32
    %c0_i32_1 = arith.constant 0 : i32
    return %c0_i32, %c0_i32_0 : i32, i32
  }
  func.func @transform_7(%arg0: i32) -> (i32, i32) {
    %c0_i32 = arith.constant 0 : i32
    %c0_i32_0 = arith.constant 0 : i32
    %c0_i32_1 = arith.constant 0 : i32
    return %c0_i32, %c0_i32_0 : i32, i32
  }
  func.func @transform_8(%arg0: i32) -> (i32, i32) {
    %c0_i32 = arith.constant 0 : i32
    %c0_i32_0 = arith.constant 0 : i32
    %c0_i32_1 = arith.constant 0 : i32
    return %c0_i32, %c0_i32_0 : i32, i32
  }
  func.func @transform_9(%arg0: i32) -> (i32, i32) {
    %c0_i32 = arith.constant 0 : i32
    %c0_i32_0 = arith.constant 0 : i32
    %c0_i32_1 = arith.constant 0 : i32
    return %c0_i32, %c0_i32_0 : i32, i32
  }
  func.func @transform_10(%arg0: i32) -> (i32, i32) {
    %c0_i32 = arith.constant 0 : i32
    %c0_i32_0 = arith.constant 0 : i32
    %c0_i32_1 = arith.constant 0 : i32
    return %c0_i32, %c0_i32_0 : i32, i32
  }
  func.func @transform_11(%arg0: i32) -> (i32, i32) {
    %c0_i32 = arith.constant 0 : i32
    %c0_i32_0 = arith.constant 0 : i32
    %c0_i32_1 = arith.constant 0 : i32
    return %c0_i32, %c0_i32_0 : i32, i32
  }
  func.func @transform_12(%arg0: i32) -> (i32, i32) {
    %c0_i32 = arith.constant 0 : i32
    %c0_i32_0 = arith.constant 0 : i32
    %c0_i32_1 = arith.constant 0 : i32
    return %c0_i32, %c0_i32_0 : i32, i32
  }
  func.func @transform_13(%arg0: i32) -> (i32, i32) {
    %c0_i32 = arith.constant 0 : i32
    %c0_i32_0 = arith.constant 0 : i32
    %c0_i32_1 = arith.constant 0 : i32
    return %c0_i32, %c0_i32_0 : i32, i32
  }
  func.func @transform_14(%arg0: i32) -> (i32, i32) {
    %c0_i32 = arith.constant 0 : i32
    %c0_i32_0 = arith.constant 0 : i32
    %c0_i32_1 = arith.constant 0 : i32
    return %c0_i32, %c0_i32_0 : i32, i32
  }
  func.func @transform_15(%arg0: i32) -> (i32, i32) {
    %c0_i32 = arith.constant 0 : i32
    %c0_i32_0 = arith.constant 0 : i32
    %c0_i32_1 = arith.constant 0 : i32
    return %c0_i32, %c0_i32_0 : i32, i32
  }
  func.func @transform_16(%arg0: i32) -> (i32, i32) {
    %c0_i32 = arith.constant 0 : i32
    %c0_i32_0 = arith.constant 0 : i32
    %c0_i32_1 = arith.constant 0 : i32
    return %c0_i32, %c0_i32_0 : i32, i32
  }
  func.func @transform_17(%arg0: i32) -> (i32, i32) {
    %c0_i32 = arith.constant 0 : i32
    %c0_i32_0 = arith.constant 0 : i32
    %c0_i32_1 = arith.constant 0 : i32
    return %c0_i32, %c0_i32_0 : i32, i32
  }
  func.func @transform_18(%arg0: i32) -> (i32, i32) {
    %c0_i32 = arith.constant 0 : i32
    %c0_i32_0 = arith.constant 0 : i32
    %c0_i32_1 = arith.constant 0 : i32
    return %c0_i32, %c0_i32_0 : i32, i32
  }
  func.func @transform_19(%arg0: i32) -> (i32, i32) {
    %c0_i32 = arith.constant 0 : i32
    %c0_i32_0 = arith.constant 0 : i32
    %c0_i32_1 = arith.constant 0 : i32
    return %c0_i32, %c0_i32_0 : i32, i32
  }
  func.func @transform_20(%arg0: i32) -> (i32, i32) {
    %c0_i32 = arith.constant 0 : i32
    %c0_i32_0 = arith.constant 0 : i32
    %c0_i32_1 = arith.constant 0 : i32
    return %c0_i32, %c0_i32_0 : i32, i32
  }
  func.func @transform_21(%arg0: i32) -> (i32, i32) {
    %c0_i32 = arith.constant 0 : i32
    %c0_i32_0 = arith.constant 0 : i32
    %c0_i32_1 = arith.constant 0 : i32
    return %c0_i32, %c0_i32_0 : i32, i32
  }
  func.func @transform_22(%arg0: i32) -> (i32, i32) {
    %c0_i32 = arith.constant 0 : i32
    %c0_i32_0 = arith.constant 0 : i32
    %c0_i32_1 = arith.constant 0 : i32
    return %c0_i32, %c0_i32_0 : i32, i32
  }
  func.func @transform_23(%arg0: i32) -> (i32, i32) {
    %c0_i32 = arith.constant 0 : i32
    %c0_i32_0 = arith.constant 0 : i32
    %c0_i32_1 = arith.constant 0 : i32
    return %c0_i32, %c0_i32_0 : i32, i32
  }
  func.func @transform_24(%arg0: i32) -> (i32, i32) {
    %c0_i32 = arith.constant 0 : i32
    %c0_i32_0 = arith.constant 0 : i32
    %c0_i32_1 = arith.constant 0 : i32
    return %c0_i32, %c0_i32_0 : i32, i32
  }
  func.func @transform_25(%arg0: i32) -> (i32, i32) {
    %c0_i32 = arith.constant 0 : i32
    %c0_i32_0 = arith.constant 0 : i32
    %c0_i32_1 = arith.constant 0 : i32
    return %c0_i32, %c0_i32_0 : i32, i32
  }
  func.func @transform_26(%arg0: i32) -> (i32, i32) {
    %c0_i32 = arith.constant 0 : i32
    %c0_i32_0 = arith.constant 0 : i32
    %c0_i32_1 = arith.constant 0 : i32
    return %c0_i32, %c0_i32_0 : i32, i32
  }
  func.func @transform_27(%arg0: i32) -> (i32, i32) {
    %c0_i32 = arith.constant 0 : i32
    %c0_i32_0 = arith.constant 0 : i32
    %c0_i32_1 = arith.constant 0 : i32
    return %c0_i32, %c0_i32_0 : i32, i32
  }
  func.func @transform_28(%arg0: i32) -> (i32, i32) {
    %c0_i32 = arith.constant 0 : i32
    %c0_i32_0 = arith.constant 0 : i32
    %c0_i32_1 = arith.constant 0 : i32
    return %c0_i32, %c0_i32_0 : i32, i32
  }
  func.func @transform_29(%arg0: i32) -> (i32, i32) {
    %c0_i32 = arith.constant 0 : i32
    %c0_i32_0 = arith.constant 0 : i32
    return %arg0, %c0_i32 : i32, i32
  }
}

</mosaic_0001>

<llo_original>
// kernel: tpu_custom_call.1
$region0: #{tpu_custom_call.1}
  #allocation0 [shape = 'u32[]', space=smem, size = 0x4, offset = 0x4, fixed_abs, tag = 'smem constant byte address 0x4 - core index']
  #allocation1 [shape = 'u32[144,128]{1,0:T(1,128)}', space=vmem, size = 0x12000, scoped, tag = 'internal scratch']
  %s0 = inlined_call_operand.smem [shape: u32[30], index: -1, kind: input, shape index: {}]
  %s1 = sld [smem:[%s0]]
  %s2 = scalar_lea.smem %s0, 1
  %s3 = sld [smem:[%s2]]
  %s4 = scalar_lea.smem %s0, 2
  %s5 = sld [smem:[%s4]]
  %s6 = scalar_lea.smem %s0, 3
  %s7 = sld [smem:[%s6]]
  %s8 = scalar_lea.smem %s0, 4
  %s9 = sld [smem:[%s8]]
  %s10 = scalar_lea.smem %s0, 5
  %s11 = sld [smem:[%s10]]
  %s12 = scalar_lea.smem %s0, 6
  %s13 = sld [smem:[%s12]]
  %s14 = scalar_lea.smem %s0, 7
  %s15 = sld [smem:[%s14]]
  %s16 = scalar_lea.smem %s0, 8
  %s17 = sld [smem:[%s16]]
  %s18 = scalar_lea.smem %s0, 9
  %s19 = sld [smem:[%s18]]
  %s20 = scalar_lea.smem %s0, 10
  %s21 = sld [smem:[%s20]]
  %s22 = scalar_lea.smem %s0, 11
  %s23 = sld [smem:[%s22]]
  %s24 = scalar_lea.smem %s0, 12
  %s25 = sld [smem:[%s24]]
  %s26 = scalar_lea.smem %s0, 13
  %s27 = sld [smem:[%s26]]
  %s28 = scalar_lea.smem %s0, 14
  %s29 = sld [smem:[%s28]]
  %s30 = scalar_lea.smem %s0, 15
  %s31 = sld [smem:[%s30]]
  %s32 = scalar_lea.smem %s0, 16
  %s33 = sld [smem:[%s32]]
  %s34 = scalar_lea.smem %s0, 17
  %s35 = sld [smem:[%s34]]
  %s36 = scalar_lea.smem %s0, 18
  %s37 = sld [smem:[%s36]]
  %s38 = scalar_lea.smem %s0, 19
  %s39 = sld [smem:[%s38]]
  %s40 = scalar_lea.smem %s0, 20
  %s41 = sld [smem:[%s40]]
  %s42 = scalar_lea.smem %s0, 21
  %s43 = sld [smem:[%s42]]
  %s44 = scalar_lea.smem %s0, 22
  %s45 = sld [smem:[%s44]]
  %s46 = scalar_lea.smem %s0, 23
  %s47 = sld [smem:[%s46]]
  %s48 = scalar_lea.smem %s0, 24
  %s49 = sld [smem:[%s48]]
  %s50 = scalar_lea.smem %s0, 25
  %s51 = sld [smem:[%s50]]
  %s52 = scalar_lea.smem %s0, 26
  %s53 = sld [smem:[%s52]]
  %s54 = scalar_lea.smem %s0, 27
  %s55 = sld [smem:[%s54]]
  %s56 = scalar_lea.smem %s0, 28
  %s57 = sld [smem:[%s56]]
  %s58 = scalar_lea.smem %s0, 29
  %s59 = sld [smem:[%s58]]
  %s60 = sld [smem:[#allocation0]]
  $region126: #{tpu_custom_call.1} parent=0
    _
  %s62 = ssub.s32 1, %s60
  %s63 = scalar_select 0, %s62, %s60
  $region1: #{tpu_custom_call.1} parent=0
    #allocation2 [shape = 'u8[4096]{0}', space=vmem, size = 0x1000, scoped, tag = 'output window, operand 0, single buffered']
    #allocation3 [shape = 's32[1]{0}', space=sflag, size = 0x4, scoped, tag = 'scoped memory for tpu_custom_call.1']
    %64 = vsyncpa [#allocation3], 0
    // Predicated region
    $region2: #{tpu_custom_call.1} parent=1 // pred_check
      _
    $region3: #{tpu_custom_call.1} parent=1 // pred_check_branch
      %66 = sbr.rel (0) target = $region5
    $region4: #{tpu_custom_call.1} parent=1 // pred_region
      _
    $region5: #{tpu_custom_call.1} parent=1 // pred_fallthru
      _
    // Predicated region
    $region6: #{tpu_custom_call.1} parent=1 // pred_check
      _
    $region7: #{tpu_custom_call.1} parent=1 // pred_check_branch
      %68 = sbr.rel (0) target = $region9
    $region8: #{tpu_custom_call.1} parent=1 // pred_region
      _
    $region9: #{tpu_custom_call.1} parent=1 // pred_fallthru
      _
    // Predicated region
    $region10: #{tpu_custom_call.1} parent=1 // pred_check
      _
    $region11: #{tpu_custom_call.1} parent=1 // pred_check_branch
      %70 = sbr.rel (0) target = $region13
    $region12: #{tpu_custom_call.1} parent=1 // pred_region
      _
    $region13: #{tpu_custom_call.1} parent=1 // pred_fallthru
      _
    // Predicated region
    $region14: #{tpu_custom_call.1} parent=1 // pred_check
      _
    $region15: #{tpu_custom_call.1} parent=1 // pred_check_branch
      %72 = sbr.rel (0) target = $region17
    $region16: #{tpu_custom_call.1} parent=1 // pred_region
      _
    $region17: #{tpu_custom_call.1} parent=1 // pred_fallthru
      _
    // Predicated region
    $region18: #{tpu_custom_call.1} parent=1 // pred_check
      _
    $region19: #{tpu_custom_call.1} parent=1 // pred_check_branch
      %74 = sbr.rel (0) target = $region21
    $region20: #{tpu_custom_call.1} parent=1 // pred_region
      _
    $region21: #{tpu_custom_call.1} parent=1 // pred_fallthru
      _
    // Predicated region
    $region22: #{tpu_custom_call.1} parent=1 // pred_check
      _
    $region23: #{tpu_custom_call.1} parent=1 // pred_check_branch
      %76 = sbr.rel (0) target = $region25
    $region24: #{tpu_custom_call.1} parent=1 // pred_region
      _
    $region25: #{tpu_custom_call.1} parent=1 // pred_fallthru
      _
    // Predicated region
    $region26: #{tpu_custom_call.1} parent=1 // pred_check
      _
    $region27: #{tpu_custom_call.1} parent=1 // pred_check_branch
      %78 = sbr.rel (0) target = $region29
    $region28: #{tpu_custom_call.1} parent=1 // pred_region
      _
    $region29: #{tpu_custom_call.1} parent=1 // pred_fallthru
      _
    // Predicated region
    $region30: #{tpu_custom_call.1} parent=1 // pred_check
      _
    $region31: #{tpu_custom_call.1} parent=1 // pred_check_branch
      %80 = sbr.rel (0) target = $region33
    $region32: #{tpu_custom_call.1} parent=1 // pred_region
      _
    $region33: #{tpu_custom_call.1} parent=1 // pred_fallthru
      _
    // Predicated region
    $region34: #{tpu_custom_call.1} parent=1 // pred_check
      _
    $region35: #{tpu_custom_call.1} parent=1 // pred_check_branch
      %82 = sbr.rel (0) target = $region37
    $region36: #{tpu_custom_call.1} parent=1 // pred_region
      _
    $region37: #{tpu_custom_call.1} parent=1 // pred_fallthru
      _
    // Predicated region
    $region38: #{tpu_custom_call.1} parent=1 // pred_check
      _
    $region39: #{tpu_custom_call.1} parent=1 // pred_check_branch
      %84 = sbr.rel (0) target = $region41
    $region40: #{tpu_custom_call.1} parent=1 // pred_region
      _
    $region41: #{tpu_custom_call.1} parent=1 // pred_fallthru
      _
    // Predicated region
    $region42: #{tpu_custom_call.1} parent=1 // pred_check
      _
    $region43: #{tpu_custom_call.1} parent=1 // pred_check_branch
      %86 = sbr.rel (0) target = $region45
    $region44: #{tpu_custom_call.1} parent=1 // pred_region
      _
    $region45: #{tpu_custom_call.1} parent=1 // pred_fallthru
      _
    // Predicated region
    $region46: #{tpu_custom_call.1} parent=1 // pred_check
      _
    $region47: #{tpu_custom_call.1} parent=1 // pred_check_branch
      %88 = sbr.rel (0) target = $region49
    $region48: #{tpu_custom_call.1} parent=1 // pred_region
      _
    $region49: #{tpu_custom_call.1} parent=1 // pred_fallthru
      _
    // Predicated region
    $region50: #{tpu_custom_call.1} parent=1 // pred_check
      _
    $region51: #{tpu_custom_call.1} parent=1 // pred_check_branch
      %90 = sbr.rel (0) target = $region53
    $region52: #{tpu_custom_call.1} parent=1 // pred_region
      _
    $region53: #{tpu_custom_call.1} parent=1 // pred_fallthru
      _
    // Predicated region
    $region54: #{tpu_custom_call.1} parent=1 // pred_check
      _
    $region55: #{tpu_custom_call.1} parent=1 // pred_check_branch
      %92 = sbr.rel (0) target = $region57
    $region56: #{tpu_custom_call.1} parent=1 // pred_region
      _
    $region57: #{tpu_custom_call.1} parent=1 // pred_fallthru
      _
    // Predicated region
    $region58: #{tpu_custom_call.1} parent=1 // pred_check
      _
    $region59: #{tpu_custom_call.1} parent=1 // pred_check_branch
      %94 = sbr.rel (0) target = $region61
    $region60: #{tpu_custom_call.1} parent=1 // pred_region
      _
    $region61: #{tpu_custom_call.1} parent=1 // pred_fallthru
      _
    // Predicated region
    $region62: #{tpu_custom_call.1} parent=1 // pred_check
      _
    $region63: #{tpu_custom_call.1} parent=1 // pred_check_branch
      %96 = sbr.rel (0) target = $region65
    $region64: #{tpu_custom_call.1} parent=1 // pred_region
      _
    $region65: #{tpu_custom_call.1} parent=1 // pred_fallthru
      _
    // Predicated region
    $region66: #{tpu_custom_call.1} parent=1 // pred_check
      _
    $region67: #{tpu_custom_call.1} parent=1 // pred_check_branch
      %98 = sbr.rel (0) target = $region69
    $region68: #{tpu_custom_call.1} parent=1 // pred_region
      _
    $region69: #{tpu_custom_call.1} parent=1 // pred_fallthru
      _
    // Predicated region
    $region70: #{tpu_custom_call.1} parent=1 // pred_check
      _
    $region71: #{tpu_custom_call.1} parent=1 // pred_check_branch
      %100 = sbr.rel (0) target = $region73
    $region72: #{tpu_custom_call.1} parent=1 // pred_region
      _
    $region73: #{tpu_custom_call.1} parent=1 // pred_fallthru
      _
    // Predicated region
    $region74: #{tpu_custom_call.1} parent=1 // pred_check
      _
    $region75: #{tpu_custom_call.1} parent=1 // pred_check_branch
      %102 = sbr.rel (0) target = $region77
    $region76: #{tpu_custom_call.1} parent=1 // pred_region
      _
    $region77: #{tpu_custom_call.1} parent=1 // pred_fallthru
      _
    // Predicated region
    $region78: #{tpu_custom_call.1} parent=1 // pred_check
      _
    $region79: #{tpu_custom_call.1} parent=1 // pred_check_branch
      %104 = sbr.rel (0) target = $region81
    $region80: #{tpu_custom_call.1} parent=1 // pred_region
      _
    $region81: #{tpu_custom_call.1} parent=1 // pred_fallthru
      _
    // Predicated region
    $region82: #{tpu_custom_call.1} parent=1 // pred_check
      _
    $region83: #{tpu_custom_call.1} parent=1 // pred_check_branch
      %106 = sbr.rel (0) target = $region85
    $region84: #{tpu_custom_call.1} parent=1 // pred_region
      _
    $region85: #{tpu_custom_call.1} parent=1 // pred_fallthru
      _
    // Predicated region
    $region86: #{tpu_custom_call.1} parent=1 // pred_check
      _
    $region87: #{tpu_custom_call.1} parent=1 // pred_check_branch
      %108 = sbr.rel (0) target = $region89
    $region88: #{tpu_custom_call.1} parent=1 // pred_region
      _
    $region89: #{tpu_custom_call.1} parent=1 // pred_fallthru
      _
    // Predicated region
    $region90: #{tpu_custom_call.1} parent=1 // pred_check
      _
    $region91: #{tpu_custom_call.1} parent=1 // pred_check_branch
      %110 = sbr.rel (0) target = $region93
    $region92: #{tpu_custom_call.1} parent=1 // pred_region
      _
    $region93: #{tpu_custom_call.1} parent=1 // pred_fallthru
      _
    // Predicated region
    $region94: #{tpu_custom_call.1} parent=1 // pred_check
      _
    $region95: #{tpu_custom_call.1} parent=1 // pred_check_branch
      %112 = sbr.rel (0) target = $region97
    $region96: #{tpu_custom_call.1} parent=1 // pred_region
      _
    $region97: #{tpu_custom_call.1} parent=1 // pred_fallthru
      _
    // Predicated region
    $region98: #{tpu_custom_call.1} parent=1 // pred_check
      _
    $region99: #{tpu_custom_call.1} parent=1 // pred_check_branch
      %114 = sbr.rel (0) target = $region101
    $region100: #{tpu_custom_call.1} parent=1 // pred_region
      _
    $region101: #{tpu_custom_call.1} parent=1 // pred_fallthru
      _
    // Predicated region
    $region102: #{tpu_custom_call.1} parent=1 // pred_check
      _
    $region103: #{tpu_custom_call.1} parent=1 // pred_check_branch
      %116 = sbr.rel (0) target = $region105
    $region104: #{tpu_custom_call.1} parent=1 // pred_region
      _
    $region105: #{tpu_custom_call.1} parent=1 // pred_fallthru
      _
    // Predicated region
    $region106: #{tpu_custom_call.1} parent=1 // pred_check
      _
    $region107: #{tpu_custom_call.1} parent=1 // pred_check_branch
      %118 = sbr.rel (0) target = $region109
    $region108: #{tpu_custom_call.1} parent=1 // pred_region
      _
    $region109: #{tpu_custom_call.1} parent=1 // pred_fallthru
      _
    // Predicated region
    $region110: #{tpu_custom_call.1} parent=1 // pred_check
      _
    $region111: #{tpu_custom_call.1} parent=1 // pred_check_branch
      %120 = sbr.rel (0) target = $region113
    $region112: #{tpu_custom_call.1} parent=1 // pred_region
      _
    $region113: #{tpu_custom_call.1} parent=1 // pred_fallthru
      _
    // Predicated region
    $region114: #{tpu_custom_call.1} parent=1 // pred_check
      _
    $region115: #{tpu_custom_call.1} parent=1 // pred_check_branch
      %122 = sbr.rel (0) target = $region117
    $region116: #{tpu_custom_call.1} parent=1 // pred_region
      _
    $region117: #{tpu_custom_call.1} parent=1 // pred_fallthru
      _
    %v124 = vld [vmem:[%s1] sm:$0xff]
    %v125 = vld [vmem:[%s1 + $0x8] sm:$0xff]
    %v126 = vld [vmem:[%s1 + $0x10] sm:$0xff]
    %v127 = vld [vmem:[%s1 + $0x18] sm:$0xff]
    %v128 = vld [vmem:[%s1 + $0x20] sm:$0xff]
    %v129 = vld [vmem:[%s1 + $0x28] sm:$0xff]
    %v130 = vld [vmem:[%s1 + $0x30] sm:$0xff]
    %v131 = vld [vmem:[%s1 + $0x38] sm:$0xff]
    %v132 = vpack.c.bf16 %v124, %v124
    %v133 = vpack.c.bf16 %v125, %v125
    %v134 = vpack.c.bf16 %v126, %v126
    %v135 = vpack.c.bf16 %v127, %v127
    %v136 = vpack.c.bf16 %v128, %v128
    %v137 = vpack.c.bf16 %v129, %v129
    %v138 = vpack.c.bf16 %v130, %v130
    %v139 = vpack.c.bf16 %v131, %v131
    %v140 = vld [vmem:[%s7] sm:$0xf]
    %v141 = vld [vmem:[%s7 + $0x4] sm:$0xf]
    %v142 = vld [vmem:[%s7 + $0x8] sm:$0xf]
    %v143 = vld [vmem:[%s7 + $0xc] sm:$0xf]
    %v144 = vld [vmem:[%s7 + $0x10] sm:$0xf]
    %v145 = vld [vmem:[%s7 + $0x14] sm:$0xf]
    %v146 = vld [vmem:[%s7 + $0x18] sm:$0xf]
    %v147 = vld [vmem:[%s7 + $0x1c] sm:$0xf]
    %v148 = vld [vmem:[%s7 + $0x20] sm:$0xf]
    %v149 = vld [vmem:[%s7 + $0x24] sm:$0xf]
    %v150 = vld [vmem:[%s7 + $0x28] sm:$0xf]
    %v151 = vld [vmem:[%s7 + $0x2c] sm:$0xf]
    %v152 = vld [vmem:[%s7 + $0x30] sm:$0xf]
    %v153 = vld [vmem:[%s7 + $0x34] sm:$0xf]
    %v154 = vld [vmem:[%s7 + $0x38] sm:$0xf]
    %v155 = vld [vmem:[%s7 + $0x3c] sm:$0xf]
    %v156 = vld [vmem:[%s7 + $0x40] sm:$0xf]
    %v157 = vld [vmem:[%s7 + $0x44] sm:$0xf]
    %v158 = vld [vmem:[%s7 + $0x48] sm:$0xf]
    %v159 = vld [vmem:[%s7 + $0x4c] sm:$0xf]
    %v160 = vld [vmem:[%s7 + $0x50] sm:$0xf]
    %v161 = vld [vmem:[%s7 + $0x54] sm:$0xf]
    %v162 = vld [vmem:[%s7 + $0x58] sm:$0xf]
    %v163 = vld [vmem:[%s7 + $0x5c] sm:$0xf]
    %v164 = vld [vmem:[%s7 + $0x60] sm:$0xf]
    %v165 = vld [vmem:[%s7 + $0x64] sm:$0xf]
    %v166 = vld [vmem:[%s7 + $0x68] sm:$0xf]
    %v167 = vld [vmem:[%s7 + $0x6c] sm:$0xf]
    %v168 = vld [vmem:[%s7 + $0x70] sm:$0xf]
    %v169 = vld [vmem:[%s7 + $0x74] sm:$0xf]
    %v170 = vld [vmem:[%s7 + $0x78] sm:$0xf]
    %v171 = vld [vmem:[%s7 + $0x7c] sm:$0xf]
    %v172 = vld [vmem:[%s7 + $0x80] sm:$0xf]
    %v173 = vld [vmem:[%s7 + $0x84] sm:$0xf]
    %v174 = vld [vmem:[%s7 + $0x88] sm:$0xf]
    %v175 = vld [vmem:[%s7 + $0x8c] sm:$0xf]
    %v176 = vld [vmem:[%s7 + $0x90] sm:$0xf]
    %v177 = vld [vmem:[%s7 + $0x94] sm:$0xf]
    %v178 = vld [vmem:[%s7 + $0x98] sm:$0xf]
    %v179 = vld [vmem:[%s7 + $0x9c] sm:$0xf]
    %v180 = vld [vmem:[%s7 + $0xa0] sm:$0xf]
    %v181 = vld [vmem:[%s7 + $0xa4] sm:$0xf]
    %v182 = vld [vmem:[%s7 + $0xa8] sm:$0xf]
    %v183 = vld [vmem:[%s7 + $0xac] sm:$0xf]
    %v184 = vld [vmem:[%s7 + $0xb0] sm:$0xf]
    %v185 = vld [vmem:[%s7 + $0xb4] sm:$0xf]
    %v186 = vld [vmem:[%s7 + $0xb8] sm:$0xf]
    %v187 = vld [vmem:[%s7 + $0xbc] sm:$0xf]
    %v188 = vld [vmem:[%s7 + $0xc0] sm:$0xf]
    %v189 = vld [vmem:[%s7 + $0xc4] sm:$0xf]
    %v190 = vld [vmem:[%s7 + $0xc8] sm:$0xf]
    %v191 = vld [vmem:[%s7 + $0xcc] sm:$0xf]
    %v192 = vld [vmem:[%s7 + $0xd0] sm:$0xf]
    %v193 = vld [vmem:[%s7 + $0xd4] sm:$0xf]
    %v194 = vld [vmem:[%s7 + $0xd8] sm:$0xf]
    %v195 = vld [vmem:[%s7 + $0xdc] sm:$0xf]
    %v196 = vld [vmem:[%s7 + $0xe0] sm:$0xf]
    %v197 = vld [vmem:[%s7 + $0xe4] sm:$0xf]
    %v198 = vld [vmem:[%s7 + $0xe8] sm:$0xf]
    %v199 = vld [vmem:[%s7 + $0xec] sm:$0xf]
    %v200 = vld [vmem:[%s7 + $0xf0] sm:$0xf]
    %v201 = vld [vmem:[%s7 + $0xf4] sm:$0xf]
    %v202 = vld [vmem:[%s7 + $0xf8] sm:$0xf]
    %v203 = vld [vmem:[%s7 + $0xfc] sm:$0xf]
    %v204 = vld [vmem:[%s7 + $0x100] sm:$0xf]
    %v205 = vld [vmem:[%s7 + $0x104] sm:$0xf]
    %v206 = vld [vmem:[%s7 + $0x108] sm:$0xf]
    %v207 = vld [vmem:[%s7 + $0x10c] sm:$0xf]
    %v208 = vld [vmem:[%s7 + $0x110] sm:$0xf]
    %v209 = vld [vmem:[%s7 + $0x114] sm:$0xf]
    %v210 = vld [vmem:[%s7 + $0x118] sm:$0xf]
    %v211 = vld [vmem:[%s7 + $0x11c] sm:$0xf]
    %v212 = vld [vmem:[%s7 + $0x120] sm:$0xf]
    %v213 = vld [vmem:[%s7 + $0x124] sm:$0xf]
    %v214 = vld [vmem:[%s7 + $0x128] sm:$0xf]
    %v215 = vld [vmem:[%s7 + $0x12c] sm:$0xf]
    %v216 = vld [vmem:[%s7 + $0x130] sm:$0xf]
    %v217 = vld [vmem:[%s7 + $0x134] sm:$0xf]
    %v218 = vld [vmem:[%s7 + $0x138] sm:$0xf]
    %v219 = vld [vmem:[%s7 + $0x13c] sm:$0xf]
    %v220 = vld [vmem:[%s7 + $0x140] sm:$0xf]
    %v221 = vld [vmem:[%s7 + $0x144] sm:$0xf]
    %v222 = vld [vmem:[%s7 + $0x148] sm:$0xf]
    %v223 = vld [vmem:[%s7 + $0x14c] sm:$0xf]
    %v224 = vld [vmem:[%s7 + $0x150] sm:$0xf]
    %v225 = vld [vmem:[%s7 + $0x154] sm:$0xf]
    %v226 = vld [vmem:[%s7 + $0x158] sm:$0xf]
    %v227 = vld [vmem:[%s7 + $0x15c] sm:$0xf]
    %v228 = vld [vmem:[%s7 + $0x160] sm:$0xf]
    %v229 = vld [vmem:[%s7 + $0x164] sm:$0xf]
    %v230 = vld [vmem:[%s7 + $0x168] sm:$0xf]
    %v231 = vld [vmem:[%s7 + $0x16c] sm:$0xf]
    %v232 = vld [vmem:[%s7 + $0x170] sm:$0xf]
    %v233 = vld [vmem:[%s7 + $0x174] sm:$0xf]
    %v234 = vld [vmem:[%s7 + $0x178] sm:$0xf]
    %v235 = vld [vmem:[%s7 + $0x17c] sm:$0xf]
    %v236 = vld [vmem:[%s7 + $0x180] sm:$0xf]
    %v237 = vld [vmem:[%s7 + $0x184] sm:$0xf]
    %v238 = vld [vmem:[%s7 + $0x188] sm:$0xf]
    %v239 = vld [vmem:[%s7 + $0x18c] sm:$0xf]
    %v240 = vld [vmem:[%s7 + $0x190] sm:$0xf]
    %v241 = vld [vmem:[%s7 + $0x194] sm:$0xf]
    %v242 = vld [vmem:[%s7 + $0x198] sm:$0xf]
    %v243 = vld [vmem:[%s7 + $0x19c] sm:$0xf]
    %v244 = vld [vmem:[%s7 + $0x1a0] sm:$0xf]
    %v245 = vld [vmem:[%s7 + $0x1a4] sm:$0xf]
    %v246 = vld [vmem:[%s7 + $0x1a8] sm:$0xf]
    %v247 = vld [vmem:[%s7 + $0x1ac] sm:$0xf]
    %v248 = vld [vmem:[%s7 + $0x1b0] sm:$0xf]
    %v249 = vld [vmem:[%s7 + $0x1b4] sm:$0xf]
    %v250 = vld [vmem:[%s7 + $0x1b8] sm:$0xf]
    %v251 = vld [vmem:[%s7 + $0x1bc] sm:$0xf]
    %v252 = vld [vmem:[%s7 + $0x1c0] sm:$0xf]
    %v253 = vld [vmem:[%s7 + $0x1c4] sm:$0xf]
    %v254 = vld [vmem:[%s7 + $0x1c8] sm:$0xf]
    %v255 = vld [vmem:[%s7 + $0x1cc] sm:$0xf]
    %v256 = vld [vmem:[%s7 + $0x1d0] sm:$0xf]
    %v257 = vld [vmem:[%s7 + $0x1d4] sm:$0xf]
    %v258 = vld [vmem:[%s7 + $0x1d8] sm:$0xf]
    %v259 = vld [vmem:[%s7 + $0x1dc] sm:$0xf]
    %v260 = vld [vmem:[%s7 + $0x1e0] sm:$0xf]
    %v261 = vld [vmem:[%s7 + $0x1e4] sm:$0xf]
    %v262 = vld [vmem:[%s7 + $0x1e8] sm:$0xf]
    %v263 = vld [vmem:[%s7 + $0x1ec] sm:$0xf]
    %v264 = vld [vmem:[%s7 + $0x1f0] sm:$0xf]
    %v265 = vld [vmem:[%s7 + $0x1f4] sm:$0xf]
    %v266 = vld [vmem:[%s7 + $0x1f8] sm:$0xf]
    %v267 = vld [vmem:[%s7 + $0x1fc] sm:$0xf]
    %v268 = vld [vmem:[%s9] sm:$0x1]
    %v270 = vlaneseq
    %v271 = vshrl.u32 %v270, 7
    %v272 = vsub.s32 0, %v271
    %v273 = vrot.slane %v268, %v272
    %v403 = vunpack.c.l.b16 %v140
    %v404 = vunpack.c.l.b16 %v141
    %v405 = vunpack.c.l.b16 %v142
    %v406 = vunpack.c.l.b16 %v143
    %v407 = vunpack.c.l.b16 %v144
    %v408 = vunpack.c.l.b16 %v145
    %v409 = vunpack.c.l.b16 %v146
    %v410 = vunpack.c.l.b16 %v147
    %v411 = vunpack.c.l.b16 %v148
    %v412 = vunpack.c.l.b16 %v149
    %v413 = vunpack.c.l.b16 %v150
    %v414 = vunpack.c.l.b16 %v151
    %v415 = vunpack.c.l.b16 %v152
    %v416 = vunpack.c.l.b16 %v153
    %v417 = vunpack.c.l.b16 %v154
    %v418 = vunpack.c.l.b16 %v155
    %v419 = vunpack.c.l.b16 %v156
    %v420 = vunpack.c.l.b16 %v157
    %v421 = vunpack.c.l.b16 %v158
    %v422 = vunpack.c.l.b16 %v159
    %v423 = vunpack.c.l.b16 %v160
    %v424 = vunpack.c.l.b16 %v161
    %v425 = vunpack.c.l.b16 %v162
    %v426 = vunpack.c.l.b16 %v163
    %v427 = vunpack.c.l.b16 %v164
    %v428 = vunpack.c.l.b16 %v165
    %v429 = vunpack.c.l.b16 %v166
    %v430 = vunpack.c.l.b16 %v167
    %v431 = vunpack.c.l.b16 %v168
    %v432 = vunpack.c.l.b16 %v169
    %v433 = vunpack.c.l.b16 %v170
    %v434 = vunpack.c.l.b16 %v171
    %v435 = vunpack.c.l.b16 %v172
    %v436 = vunpack.c.l.b16 %v173
    %v437 = vunpack.c.l.b16 %v174
    %v438 = vunpack.c.l.b16 %v175
    %v439 = vunpack.c.l.b16 %v176
    %v440 = vunpack.c.l.b16 %v177
    %v441 = vunpack.c.l.b16 %v178
    %v442 = vunpack.c.l.b16 %v179
    %v443 = vunpack.c.l.b16 %v180
    %v444 = vunpack.c.l.b16 %v181
    %v445 = vunpack.c.l.b16 %v182
    %v446 = vunpack.c.l.b16 %v183
    %v447 = vunpack.c.l.b16 %v184
    %v448 = vunpack.c.l.b16 %v185
    %v449 = vunpack.c.l.b16 %v186
    %v450 = vunpack.c.l.b16 %v187
    %v451 = vunpack.c.l.b16 %v188
    %v452 = vunpack.c.l.b16 %v189
    %v453 = vunpack.c.l.b16 %v190
    %v454 = vunpack.c.l.b16 %v191
    %v455 = vunpack.c.l.b16 %v192
    %v456 = vunpack.c.l.b16 %v193
    %v457 = vunpack.c.l.b16 %v194
    %v458 = vunpack.c.l.b16 %v195
    %v459 = vunpack.c.l.b16 %v196
    %v460 = vunpack.c.l.b16 %v197
    %v461 = vunpack.c.l.b16 %v198
    %v462 = vunpack.c.l.b16 %v199
    %v463 = vunpack.c.l.b16 %v200
    %v464 = vunpack.c.l.b16 %v201
    %v465 = vunpack.c.l.b16 %v202
    %v466 = vunpack.c.l.b16 %v203
    %v467 = vunpack.c.l.b16 %v204
    %v468 = vunpack.c.l.b16 %v205
    %v469 = vunpack.c.l.b16 %v206
    %v470 = vunpack.c.l.b16 %v207
    %v471 = vunpack.c.l.b16 %v208
    %v472 = vunpack.c.l.b16 %v209
    %v473 = vunpack.c.l.b16 %v210
    %v474 = vunpack.c.l.b16 %v211
    %v475 = vunpack.c.l.b16 %v212
    %v476 = vunpack.c.l.b16 %v213
    %v477 = vunpack.c.l.b16 %v214
    %v478 = vunpack.c.l.b16 %v215
    %v479 = vunpack.c.l.b16 %v216
    %v480 = vunpack.c.l.b16 %v217
    %v481 = vunpack.c.l.b16 %v218
    %v482 = vunpack.c.l.b16 %v219
    %v483 = vunpack.c.l.b16 %v220
    %v484 = vunpack.c.l.b16 %v221
    %v485 = vunpack.c.l.b16 %v222
    %v486 = vunpack.c.l.b16 %v223
    %v487 = vunpack.c.l.b16 %v224
    %v488 = vunpack.c.l.b16 %v225
    %v489 = vunpack.c.l.b16 %v226
    %v490 = vunpack.c.l.b16 %v227
    %v491 = vunpack.c.l.b16 %v228
    %v492 = vunpack.c.l.b16 %v229
    %v493 = vunpack.c.l.b16 %v230
    %v494 = vunpack.c.l.b16 %v231
    %v495 = vunpack.c.l.b16 %v232
    %v496 = vunpack.c.l.b16 %v233
    %v497 = vunpack.c.l.b16 %v234
    %v498 = vunpack.c.l.b16 %v235
    %v499 = vunpack.c.l.b16 %v236
    %v500 = vunpack.c.l.b16 %v237
    %v501 = vunpack.c.l.b16 %v238
    %v502 = vunpack.c.l.b16 %v239
    %v503 = vunpack.c.l.b16 %v240
    %v504 = vunpack.c.l.b16 %v241
    %v505 = vunpack.c.l.b16 %v242
    %v506 = vunpack.c.l.b16 %v243
    %v507 = vunpack.c.l.b16 %v244
    %v508 = vunpack.c.l.b16 %v245
    %v509 = vunpack.c.l.b16 %v246
    %v510 = vunpack.c.l.b16 %v247
    %v511 = vunpack.c.l.b16 %v248
    %v512 = vunpack.c.l.b16 %v249
    %v513 = vunpack.c.l.b16 %v250
    %v514 = vunpack.c.l.b16 %v251
    %v515 = vunpack.c.l.b16 %v252
    %v516 = vunpack.c.l.b16 %v253
    %v517 = vunpack.c.l.b16 %v254
    %v518 = vunpack.c.l.b16 %v255
    %v519 = vunpack.c.l.b16 %v256
    %v520 = vunpack.c.l.b16 %v257
    %v521 = vunpack.c.l.b16 %v258
    %v522 = vunpack.c.l.b16 %v259
    %v523 = vunpack.c.l.b16 %v260
    %v524 = vunpack.c.l.b16 %v261
    %v525 = vunpack.c.l.b16 %v262
    %v526 = vunpack.c.l.b16 %v263
    %v527 = vunpack.c.l.b16 %v264
    %v528 = vunpack.c.l.b16 %v265
    %v529 = vunpack.c.l.b16 %v266
    %v530 = vunpack.c.l.b16 %v267
    %v531 = vpack.c.b16 %v404, %v403
    %v532 = vpack.c.b16 %v406, %v405
    %v533 = vpack.c.b16 %v408, %v407
    %v534 = vpack.c.b16 %v410, %v409
    %v535 = vpack.c.b16 %v412, %v411
    %v536 = vpack.c.b16 %v414, %v413
    %v537 = vpack.c.b16 %v416, %v415
    %v538 = vpack.c.b16 %v418, %v417
    %v539 = vpack.c.b16 %v420, %v419
    %v540 = vpack.c.b16 %v422, %v421
    %v541 = vpack.c.b16 %v424, %v423
    %v542 = vpack.c.b16 %v426, %v425
    %v543 = vpack.c.b16 %v428, %v427
    %v544 = vpack.c.b16 %v430, %v429
    %v545 = vpack.c.b16 %v432, %v431
    %v546 = vpack.c.b16 %v434, %v433
    %v547 = vpack.c.b16 %v436, %v435
    %v548 = vpack.c.b16 %v438, %v437
    %v549 = vpack.c.b16 %v440, %v439
    %v550 = vpack.c.b16 %v442, %v441
    %v551 = vpack.c.b16 %v444, %v443
    %v552 = vpack.c.b16 %v446, %v445
    %v553 = vpack.c.b16 %v448, %v447
    %v554 = vpack.c.b16 %v450, %v449
    %v555 = vpack.c.b16 %v452, %v451
    %v556 = vpack.c.b16 %v454, %v453
    %v557 = vpack.c.b16 %v456, %v455
    %v558 = vpack.c.b16 %v458, %v457
    %v559 = vpack.c.b16 %v460, %v459
    %v560 = vpack.c.b16 %v462, %v461
    %v561 = vpack.c.b16 %v464, %v463
    %v562 = vpack.c.b16 %v466, %v465
    %v563 = vpack.c.b16 %v468, %v467
    %v564 = vpack.c.b16 %v470, %v469
    %v565 = vpack.c.b16 %v472, %v471
    %v566 = vpack.c.b16 %v474, %v473
    %v567 = vpack.c.b16 %v476, %v475
    %v568 = vpack.c.b16 %v478, %v477
    %v569 = vpack.c.b16 %v480, %v479
    %v570 = vpack.c.b16 %v482, %v481
    %v571 = vpack.c.b16 %v484, %v483
    %v572 = vpack.c.b16 %v486, %v485
    %v573 = vpack.c.b16 %v488, %v487
    %v574 = vpack.c.b16 %v490, %v489
    %v575 = vpack.c.b16 %v492, %v491
    %v576 = vpack.c.b16 %v494, %v493
    %v577 = vpack.c.b16 %v496, %v495
    %v578 = vpack.c.b16 %v498, %v497
    %v579 = vpack.c.b16 %v500, %v499
    %v580 = vpack.c.b16 %v502, %v501
    %v581 = vpack.c.b16 %v504, %v503
    %v582 = vpack.c.b16 %v506, %v505
    %v583 = vpack.c.b16 %v508, %v507
    %v584 = vpack.c.b16 %v510, %v509
    %v585 = vpack.c.b16 %v512, %v511
    %v586 = vpack.c.b16 %v514, %v513
    %v587 = vpack.c.b16 %v516, %v515
    %v588 = vpack.c.b16 %v518, %v517
    %v589 = vpack.c.b16 %v520, %v519
    %v590 = vpack.c.b16 %v522, %v521
    %v591 = vpack.c.b16 %v524, %v523
    %v592 = vpack.c.b16 %v526, %v525
    %v593 = vpack.c.b16 %v528, %v527
    %v594 = vpack.c.b16 %v530, %v529
    %659 = vmatprep.subr.bf16.mxu0 0
    %660 = vmatpush1.bf16.msra.mxu0 %v538
    %661 = vmatprep.subr.bf16.mxu0 0
    %662 = vmatpush1.bf16.msra.mxu0 %v537
    %663 = vmatprep.subr.bf16.mxu0 0
    %664 = vmatpush1.bf16.msra.mxu0 %v536
    %665 = vmatprep.subr.bf16.mxu0 0
    %666 = vmatpush1.bf16.msra.mxu0 %v535
    %667 = vmatprep.subr.bf16.mxu0 0
    %668 = vmatpush1.bf16.msra.mxu0 %v534
    %669 = vmatprep.subr.bf16.mxu0 0
    %670 = vmatpush1.bf16.msra.mxu0 %v533
    %671 = vmatprep.subr.bf16.mxu0 0
    %672 = vmatpush1.bf16.msra.mxu0 %v532
    %673 = vmatprep.subr.bf16.mxu0 0
    %674 = vmatpush1.bf16.msra.mxu0 %v531
    %675 = vmatprep.subr.bf16.mxu0 0
    %676 = vmatpush2.bf16.msra.mxu0 %v546
    %677 = vmatprep.subr.bf16.mxu0 0
    %678 = vmatpush2.bf16.msra.mxu0 %v545
    %679 = vmatprep.subr.bf16.mxu0 0
    %680 = vmatpush2.bf16.msra.mxu0 %v544
    %681 = vmatprep.subr.bf16.mxu0 0
    %682 = vmatpush2.bf16.msra.mxu0 %v543
    %683 = vmatprep.subr.bf16.mxu0 0
    %684 = vmatpush2.bf16.msra.mxu0 %v542
    %685 = vmatprep.subr.bf16.mxu0 0
    %686 = vmatpush2.bf16.msra.mxu0 %v541
    %687 = vmatprep.subr.bf16.mxu0 0
    %688 = vmatpush2.bf16.msra.mxu0 %v540
    %689 = vmatprep.subr.bf16.mxu0 0
    %690 = vmatpush2.bf16.msra.mxu0 %v539
    %691 = vmatprep.mubr.bf16.mxu0 %v133
    %692 = vmatmul.mubr.bf16.gmra.mxu0 %v132
    %v693 = vpop.f32.mrf.mxu0
    %v694 = vadd.f32 %v273, %v693
    %v695 = vpop.f32.mrf.mxu0
    %v696 = vpop.f32.mrf.mxu0
    %v697 = vpop.f32.mrf.mxu0
    %698 = vdwg.mxu0
    %699 = vmatprep.subr.bf16.mxu0 0
    %700 = vmatpush1.bf16.msra.mxu0 %v554
    %701 = vmatprep.subr.bf16.mxu0 0
    %702 = vmatpush1.bf16.msra.mxu0 %v553
    %703 = vmatprep.subr.bf16.mxu0 0
    %704 = vmatpush1.bf16.msra.mxu0 %v552
    %705 = vmatprep.subr.bf16.mxu0 0
    %706 = vmatpush1.bf16.msra.mxu0 %v551
    %707 = vmatprep.subr.bf16.mxu0 0
    %708 = vmatpush1.bf16.msra.mxu0 %v550
    %709 = vmatprep.subr.bf16.mxu0 0
    %710 = vmatpush1.bf16.msra.mxu0 %v549
    %711 = vmatprep.subr.bf16.mxu0 0
    %712 = vmatpush1.bf16.msra.mxu0 %v548
    %713 = vmatprep.subr.bf16.mxu0 0
    %714 = vmatpush1.bf16.msra.mxu0 %v547
    %715 = vmatprep.subr.bf16.mxu0 0
    %716 = vmatpush2.bf16.msra.mxu0 %v562
    %717 = vmatprep.subr.bf16.mxu0 0
    %718 = vmatpush2.bf16.msra.mxu0 %v561
    %719 = vmatprep.subr.bf16.mxu0 0
    %720 = vmatpush2.bf16.msra.mxu0 %v560
    %721 = vmatprep.subr.bf16.mxu0 0
    %722 = vmatpush2.bf16.msra.mxu0 %v559
    %723 = vmatprep.subr.bf16.mxu0 0
    %724 = vmatpush2.bf16.msra.mxu0 %v558
    %725 = vmatprep.subr.bf16.mxu0 0
    %726 = vmatpush2.bf16.msra.mxu0 %v557
    %727 = vmatprep.subr.bf16.mxu0 0
    %728 = vmatpush2.bf16.msra.mxu0 %v556
    %729 = vmatprep.subr.bf16.mxu0 0
    %730 = vmatpush2.bf16.msra.mxu0 %v555
    %731 = vmatprep.mubr.bf16.mxu0 %v135
    %732 = vmatmul.mubr.bf16.gmra.mxu0 %v134
    %v733 = vpop.f32.mrf.mxu0
    %v734 = vadd.f32 %v694, %v733
    %v735 = vpop.f32.mrf.mxu0
    %v736 = vpop.f32.mrf.mxu0
    %v737 = vpop.f32.mrf.mxu0
    %738 = vdwg.mxu0
    %739 = vmatprep.subr.bf16.mxu0 0
    %740 = vmatpush1.bf16.msra.mxu0 %v570
    %741 = vmatprep.subr.bf16.mxu0 0
    %742 = vmatpush1.bf16.msra.mxu0 %v569
    %743 = vmatprep.subr.bf16.mxu0 0
    %744 = vmatpush1.bf16.msra.mxu0 %v568
    %745 = vmatprep.subr.bf16.mxu0 0
    %746 = vmatpush1.bf16.msra.mxu0 %v567
    %747 = vmatprep.subr.bf16.mxu0 0
    %748 = vmatpush1.bf16.msra.mxu0 %v566
    %749 = vmatprep.subr.bf16.mxu0 0
    %750 = vmatpush1.bf16.msra.mxu0 %v565
    %751 = vmatprep.subr.bf16.mxu0 0
    %752 = vmatpush1.bf16.msra.mxu0 %v564
    %753 = vmatprep.subr.bf16.mxu0 0
    %754 = vmatpush1.bf16.msra.mxu0 %v563
    %755 = vmatprep.subr.bf16.mxu0 0
    %756 = vmatpush2.bf16.msra.mxu0 %v578
    %757 = vmatprep.subr.bf16.mxu0 0
    %758 = vmatpush2.bf16.msra.mxu0 %v577
    %759 = vmatprep.subr.bf16.mxu0 0
    %760 = vmatpush2.bf16.msra.mxu0 %v576
    %761 = vmatprep.subr.bf16.mxu0 0
    %762 = vmatpush2.bf16.msra.mxu0 %v575
    %763 = vmatprep.subr.bf16.mxu0 0
    %764 = vmatpush2.bf16.msra.mxu0 %v574
    %765 = vmatprep.subr.bf16.mxu0 0
    %766 = vmatpush2.bf16.msra.mxu0 %v573
    %767 = vmatprep.subr.bf16.mxu0 0
    %768 = vmatpush2.bf16.msra.mxu0 %v572
    %769 = vmatprep.subr.bf16.mxu0 0
    %770 = vmatpush2.bf16.msra.mxu0 %v571
    %771 = vmatprep.mubr.bf16.mxu0 %v137
    %772 = vmatmul.mubr.bf16.gmra.mxu0 %v136
    %v773 = vpop.f32.mrf.mxu0
    %v774 = vadd.f32 %v734, %v773
    %v775 = vpop.f32.mrf.mxu0
    %v776 = vpop.f32.mrf.mxu0
    %v777 = vpop.f32.mrf.mxu0
    %778 = vdwg.mxu0
    %779 = vmatprep.subr.bf16.mxu0 0
    %780 = vmatpush1.bf16.msra.mxu0 %v586
    %781 = vmatprep.subr.bf16.mxu0 0
    %782 = vmatpush1.bf16.msra.mxu0 %v585
    %783 = vmatprep.subr.bf16.mxu0 0
    %784 = vmatpush1.bf16.msra.mxu0 %v584
    %785 = vmatprep.subr.bf16.mxu0 0
    %786 = vmatpush1.bf16.msra.mxu0 %v583
    %787 = vmatprep.subr.bf16.mxu0 0
    %788 = vmatpush1.bf16.msra.mxu0 %v582
    %789 = vmatprep.subr.bf16.mxu0 0
    %790 = vmatpush1.bf16.msra.mxu0 %v581
    %791 = vmatprep.subr.bf16.mxu0 0
    %792 = vmatpush1.bf16.msra.mxu0 %v580
    %793 = vmatprep.subr.bf16.mxu0 0
    %794 = vmatpush1.bf16.msra.mxu0 %v579
    %795 = vmatprep.subr.bf16.mxu0 0
    %796 = vmatpush2.bf16.msra.mxu0 %v594
    %797 = vmatprep.subr.bf16.mxu0 0
    %798 = vmatpush2.bf16.msra.mxu0 %v593
    %799 = vmatprep.subr.bf16.mxu0 0
    %800 = vmatpush2.bf16.msra.mxu0 %v592
    %801 = vmatprep.subr.bf16.mxu0 0
    %802 = vmatpush2.bf16.msra.mxu0 %v591
    %803 = vmatprep.subr.bf16.mxu0 0
    %804 = vmatpush2.bf16.msra.mxu0 %v590
    %805 = vmatprep.subr.bf16.mxu0 0
    %806 = vmatpush2.bf16.msra.mxu0 %v589
    %807 = vmatprep.subr.bf16.mxu0 0
    %808 = vmatpush2.bf16.msra.mxu0 %v588
    %809 = vmatprep.subr.bf16.mxu0 0
    %810 = vmatpush2.bf16.msra.mxu0 %v587
    %811 = vmatprep.mubr.bf16.mxu0 %v139
    %812 = vmatmul.mubr.bf16.gmra.mxu0 %v138
    %v813 = vpop.f32.mrf.mxu0
    %v814 = vadd.f32 %v774, %v813
    %v815 = vpop.f32.mrf.mxu0
    %v816 = vpop.f32.mrf.mxu0
    %v817 = vpop.f32.mrf.mxu0
    %818 = vdwg.mxu0
    %v819 = vmax.f32 %v814, 0.0
    %v820 = vpack.c.bf16 %v819, %v819
    %v821 = vld [vmem:[%s11] sm:$0xf]
    %v822 = vld [vmem:[%s11 + $0x4] sm:$0xf]
    %v823 = vld [vmem:[%s11 + $0x8] sm:$0xf]
    %v824 = vld [vmem:[%s11 + $0xc] sm:$0xf]
    %v825 = vld [vmem:[%s13] sm:$0x1]
    %v827 = vlaneseq
    %v828 = vshrl.u32 %v827, 7
    %v829 = vsub.s32 0, %v828
    %v830 = vrot.slane %v825, %v829
    %v836 = vunpack.c.l.b16 %v821
    %v837 = vunpack.c.l.b16 %v822
    %v838 = vunpack.c.l.b16 %v823
    %v839 = vunpack.c.l.b16 %v824
    %v840 = vpack.c.b16 %v837, %v836
    %v841 = vpack.c.b16 %v839, %v838
    %vm844 = vcmask 261120
    %v846 = vsel %vm844, %v820, 0
    %848 = vmatprep.subr.bf16.mxu0 0
    %849 = vmatpush1.bf16.msra.mxu0 0
    %850 = vmatprep.subr.bf16.mxu0 0
    %851 = vmatpush1.bf16.msra.mxu0 0
    %852 = vmatprep.subr.bf16.mxu0 0
    %853 = vmatpush1.bf16.msra.mxu0 0
    %854 = vmatprep.subr.bf16.mxu0 0
    %855 = vmatpush1.bf16.msra.mxu0 0
    %856 = vmatprep.subr.bf16.mxu0 0
    %857 = vmatpush1.bf16.msra.mxu0 0
    %858 = vmatprep.subr.bf16.mxu0 0
    %859 = vmatpush1.bf16.msra.mxu0 0
    %860 = vmatprep.subr.bf16.mxu0 0
    %861 = vmatpush1.bf16.msra.mxu0 %v841
    %862 = vmatprep.subr.bf16.mxu0 0
    %863 = vmatpush1.bf16.msra.mxu0 %v840
    %864 = vmatprep.subr.bf16.mxu0 0
    %865 = vmatpush2.bf16.msra.mxu0 0
    %866 = vmatprep.subr.bf16.mxu0 0
    %867 = vmatpush2.bf16.msra.mxu0 0
    %868 = vmatprep.subr.bf16.mxu0 0
    %869 = vmatpush2.bf16.msra.mxu0 0
    %870 = vmatprep.subr.bf16.mxu0 0
    %871 = vmatpush2.bf16.msra.mxu0 0
    %872 = vmatprep.subr.bf16.mxu0 0
    %873 = vmatpush2.bf16.msra.mxu0 0
    %874 = vmatprep.subr.bf16.mxu0 0
    %875 = vmatpush2.bf16.msra.mxu0 0
    %876 = vmatprep.subr.bf16.mxu0 0
    %877 = vmatpush2.bf16.msra.mxu0 0
    %878 = vmatprep.subr.bf16.mxu0 0
    %879 = vmatpush2.bf16.msra.mxu0 0
    %880 = vmatprep.mubr.bf16.mxu0 0
    %881 = vmatmul.mubr.bf16.gmra.mxu0 %v846
    %v882 = vpop.f32.mrf.mxu0
    %v883 = vadd.f32 %v830, %v882
    %v884 = vpop.f32.mrf.mxu0
    %v885 = vpop.f32.mrf.mxu0
    %v886 = vpop.f32.mrf.mxu0
    %887 = vdwg.mxu0
    %v888 = vmax.f32 %v883, 0.0
    %v889 = vpack.c.bf16 %v888, %v888
    %v890 = vld [vmem:[%s15] sm:$0xf]
    %v891 = vld [vmem:[%s15 + $0x4] sm:$0xf]
    %v892 = vld [vmem:[%s15 + $0x8] sm:$0xf]
    %v893 = vld [vmem:[%s15 + $0xc] sm:$0xf]
    %v894 = vld [vmem:[%s17] sm:$0x1]
    %v896 = vlaneseq
    %v897 = vshrl.u32 %v896, 7
    %v898 = vsub.s32 0, %v897
    %v899 = vrot.slane %v894, %v898
    %v905 = vunpack.c.l.b16 %v890
    %v906 = vunpack.c.l.b16 %v891
    %v907 = vunpack.c.l.b16 %v892
    %v908 = vunpack.c.l.b16 %v893
    %v909 = vpack.c.b16 %v906, %v905
    %v910 = vpack.c.b16 %v908, %v907
    %v914 = vsel %vm844, %v889, 0
    %916 = vmatprep.subr.bf16.mxu0 0
    %917 = vmatpush1.bf16.msra.mxu0 0
    %918 = vmatprep.subr.bf16.mxu0 0
    %919 = vmatpush1.bf16.msra.mxu0 0
    %920 = vmatprep.subr.bf16.mxu0 0
    %921 = vmatpush1.bf16.msra.mxu0 0
    %922 = vmatprep.subr.bf16.mxu0 0
    %923 = vmatpush1.bf16.msra.mxu0 0
    %924 = vmatprep.subr.bf16.mxu0 0
    %925 = vmatpush1.bf16.msra.mxu0 0
    %926 = vmatprep.subr.bf16.mxu0 0
    %927 = vmatpush1.bf16.msra.mxu0 0
    %928 = vmatprep.subr.bf16.mxu0 0
    %929 = vmatpush1.bf16.msra.mxu0 %v910
    %930 = vmatprep.subr.bf16.mxu0 0
    %931 = vmatpush1.bf16.msra.mxu0 %v909
    %932 = vmatprep.subr.bf16.mxu0 0
    %933 = vmatpush2.bf16.msra.mxu0 0
    %934 = vmatprep.subr.bf16.mxu0 0
    %935 = vmatpush2.bf16.msra.mxu0 0
    %936 = vmatprep.subr.bf16.mxu0 0
    %937 = vmatpush2.bf16.msra.mxu0 0
    %938 = vmatprep.subr.bf16.mxu0 0
    %939 = vmatpush2.bf16.msra.mxu0 0
    %940 = vmatprep.subr.bf16.mxu0 0
    %941 = vmatpush2.bf16.msra.mxu0 0
    %942 = vmatprep.subr.bf16.mxu0 0
    %943 = vmatpush2.bf16.msra.mxu0 0
    %944 = vmatprep.subr.bf16.mxu0 0
    %945 = vmatpush2.bf16.msra.mxu0 0
    %946 = vmatprep.subr.bf16.mxu0 0
    %947 = vmatpush2.bf16.msra.mxu0 0
    %948 = vmatprep.mubr.bf16.mxu0 0
    %949 = vmatmul.mubr.bf16.gmra.mxu0 %v914
    %v950 = vpop.f32.mrf.mxu0
    %v951 = vadd.f32 %v899, %v950
    %v952 = vpop.f32.mrf.mxu0
    %v953 = vpop.f32.mrf.mxu0
    %v954 = vpop.f32.mrf.mxu0
    %955 = vdwg.mxu0
    %v956 = vld [vmem:[%s3] sm:$0xff]
    %v957 = vld [vmem:[%s5] sm:$0xff]
    %v958 = vpack.c.bf16 %v951, %v951
    %v959 = vld [vmem:[%s19] sm:$0xff]
    %v960 = vld [vmem:[%s19 + $0x8] sm:$0xf]
    %v961 = vpack.c.bf16 %v960, %v959
    %v962 = vpack.c.bf16 %v956, %v956
    %v963 = vld [vmem:[%s21] sm:$0x7]
    %v964 = vpack.c.bf16 %v963, %v963
    %vm965 = vcmask 23552
    %v967 = vsel %vm965, %v962, 0
    %vm969 = vcmask 1040384
    %vm970 = vcmask 1041408
    %v971 = vsel %vm969, 4294967295, 65535
    %v972 = vsel %vm970, %v971, 0
    %v974 = vand.u32 %v964, %v972
    %976 = vmatprep.subr.bf16.mxu0 0
    %977 = vmatpush1.bf16.msra.mxu0 0
    %978 = vmatprep.subr.bf16.mxu0 0
    %979 = vmatpush1.bf16.msra.mxu0 0
    %980 = vmatprep.subr.bf16.mxu0 0
    %981 = vmatpush1.bf16.msra.mxu0 0
    %982 = vmatprep.subr.bf16.mxu0 0
    %983 = vmatpush1.bf16.msra.mxu0 0
    %984 = vmatprep.subr.bf16.mxu0 0
    %985 = vmatpush1.bf16.msra.mxu0 0
    %986 = vmatprep.subr.bf16.mxu0 0
    %987 = vmatpush1.bf16.msra.mxu0 0
    %988 = vmatprep.subr.bf16.mxu0 0
    %989 = vmatpush1.bf16.msra.mxu0 0
    %990 = vmatprep.subr.bf16.mxu0 0
    %991 = vmatpush1.bf16.msra.mxu0 %v974
    %992 = vmatprep.subr.bf16.mxu0 0
    %993 = vmatpush2.bf16.msra.mxu0 0
    %994 = vmatprep.subr.bf16.mxu0 0
    %995 = vmatpush2.bf16.msra.mxu0 0
    %996 = vmatprep.subr.bf16.mxu0 0
    %997 = vmatpush2.bf16.msra.mxu0 0
    %998 = vmatprep.subr.bf16.mxu0 0
    %999 = vmatpush2.bf16.msra.mxu0 0
    %1000 = vmatprep.subr.bf16.mxu0 0
    %1001 = vmatpush2.bf16.msra.mxu0 0
    %1002 = vmatprep.subr.bf16.mxu0 0
    %1003 = vmatpush2.bf16.msra.mxu0 0
    %1004 = vmatprep.subr.bf16.mxu0 0
    %1005 = vmatpush2.bf16.msra.mxu0 0
    %1006 = vmatprep.subr.bf16.mxu0 0
    %1007 = vmatpush2.bf16.msra.mxu0 0
    %1008 = vmatprep.mubr.bf16.mxu0 0
    %1009 = vmatmul.mubr.bf16.gmra.mxu0 %v967
    %v1010 = vpop.f32.mrf.mxu0
    %v1011 = vadd.f32 0.0, %v1010
    %v1012 = vpop.f32.mrf.mxu0
    %v1013 = vpop.f32.mrf.mxu0
    %v1014 = vpop.f32.mrf.mxu0
    %1015 = vdwg.mxu0
    %vm1016 = vcmask 97280
    %v1018 = vsel %vm1016, %v958, 0
    %vm1020 = vcmask 1045504
    %v1022 = vsel %vm1020, %v961, 0
    %1024 = vmatprep.subr.bf16.mxu0 0
    %1025 = vmatpush1.bf16.msra.mxu0 0
    %1026 = vmatprep.subr.bf16.mxu0 0
    %1027 = vmatpush1.bf16.msra.mxu0 0
    %1028 = vmatprep.subr.bf16.mxu0 0
    %1029 = vmatpush1.bf16.msra.mxu0 0
    %1030 = vmatprep.subr.bf16.mxu0 0
    %1031 = vmatpush1.bf16.msra.mxu0 0
    %1032 = vmatprep.subr.bf16.mxu0 0
    %1033 = vmatpush1.bf16.msra.mxu0 0
    %1034 = vmatprep.subr.bf16.mxu0 0
    %1035 = vmatpush1.bf16.msra.mxu0 0
    %1036 = vmatprep.subr.bf16.mxu0 0
    %1037 = vmatpush1.bf16.msra.mxu0 0
    %1038 = vmatprep.subr.bf16.mxu0 0
    %1039 = vmatpush1.bf16.msra.mxu0 %v1022
    %1040 = vmatprep.subr.bf16.mxu0 0
    %1041 = vmatpush2.bf16.msra.mxu0 0
    %1042 = vmatprep.subr.bf16.mxu0 0
    %1043 = vmatpush2.bf16.msra.mxu0 0
    %1044 = vmatprep.subr.bf16.mxu0 0
    %1045 = vmatpush2.bf16.msra.mxu0 0
    %1046 = vmatprep.subr.bf16.mxu0 0
    %1047 = vmatpush2.bf16.msra.mxu0 0
    %1048 = vmatprep.subr.bf16.mxu0 0
    %1049 = vmatpush2.bf16.msra.mxu0 0
    %1050 = vmatprep.subr.bf16.mxu0 0
    %1051 = vmatpush2.bf16.msra.mxu0 0
    %1052 = vmatprep.subr.bf16.mxu0 0
    %1053 = vmatpush2.bf16.msra.mxu0 0
    %1054 = vmatprep.subr.bf16.mxu0 0
    %1055 = vmatpush2.bf16.msra.mxu0 0
    %1056 = vmatprep.mubr.bf16.mxu0 0
    %1057 = vmatmul.mubr.bf16.gmra.mxu0 %v1018
    %v1058 = vpop.f32.mrf.mxu0
    %v1059 = vadd.f32 %v1011, %v1058
    %v1060 = vpop.f32.mrf.mxu0
    %v1061 = vpop.f32.mrf.mxu0
    %v1062 = vpop.f32.mrf.mxu0
    %1063 = vdwg.mxu0
    %v1064 = vld [vmem:[%s23] sm:$0x1]
    %v1066 = vlaneseq
    %v1067 = vshrl.u32 %v1066, 7
    %v1068 = vsub.s32 0, %v1067
    %v1069 = vrot.slane %v1064, %v1068
    %v1071 = vadd.f32 %v1059, %v1069
    %v1072 = vmax.f32 %v1071, 0.0
    %v1073 = vpack.c.bf16 %v1072, %v1072
    %v1074 = vld [vmem:[%s25] sm:$0xff]
    %v1075 = vld [vmem:[%s25 + $0x8] sm:$0xf]
    %v1076 = vpack.c.bf16 %v1075, %v1074
    %v1077 = vld [vmem:[%s27] sm:$0x1]
    %v1079 = vlaneseq
    %v1080 = vshrl.u32 %v1079, 7
    %v1081 = vsub.s32 0, %v1080
    %v1082 = vrot.slane %v1077, %v1081
    %v1085 = vsel %vm1016, %v1073, 0
    %v1088 = vsel %vm1020, %v1076, 0
    %1090 = vmatprep.subr.bf16.mxu0 0
    %1091 = vmatpush1.bf16.msra.mxu0 0
    %1092 = vmatprep.subr.bf16.mxu0 0
    %1093 = vmatpush1.bf16.msra.mxu0 0
    %1094 = vmatprep.subr.bf16.mxu0 0
    %1095 = vmatpush1.bf16.msra.mxu0 0
    %1096 = vmatprep.subr.bf16.mxu0 0
    %1097 = vmatpush1.bf16.msra.mxu0 0
    %1098 = vmatprep.subr.bf16.mxu0 0
    %1099 = vmatpush1.bf16.msra.mxu0 0
    %1100 = vmatprep.subr.bf16.mxu0 0
    %1101 = vmatpush1.bf16.msra.mxu0 0
    %1102 = vmatprep.subr.bf16.mxu0 0
    %1103 = vmatpush1.bf16.msra.mxu0 0
    %1104 = vmatprep.subr.bf16.mxu0 0
    %1105 = vmatpush1.bf16.msra.mxu0 %v1088
    %1106 = vmatprep.subr.bf16.mxu0 0
    %1107 = vmatpush2.bf16.msra.mxu0 0
    %1108 = vmatprep.subr.bf16.mxu0 0
    %1109 = vmatpush2.bf16.msra.mxu0 0
    %1110 = vmatprep.subr.bf16.mxu0 0
    %1111 = vmatpush2.bf16.msra.mxu0 0
    %1112 = vmatprep.subr.bf16.mxu0 0
    %1113 = vmatpush2.bf16.msra.mxu0 0
    %1114 = vmatprep.subr.bf16.mxu0 0
    %1115 = vmatpush2.bf16.msra.mxu0 0
    %1116 = vmatprep.subr.bf16.mxu0 0
    %1117 = vmatpush2.bf16.msra.mxu0 0
    %1118 = vmatprep.subr.bf16.mxu0 0
    %1119 = vmatpush2.bf16.msra.mxu0 0
    %1120 = vmatprep.subr.bf16.mxu0 0
    %1121 = vmatpush2.bf16.msra.mxu0 0
    %1122 = vmatprep.mubr.bf16.mxu0 0
    %1123 = vmatmul.mubr.bf16.gmra.mxu0 %v1085
    %v1124 = vpop.f32.mrf.mxu0
    %v1125 = vadd.f32 %v1082, %v1124
    %v1126 = vpop.f32.mrf.mxu0
    %v1127 = vpop.f32.mrf.mxu0
    %v1128 = vpop.f32.mrf.mxu0
    %1129 = vdwg.mxu0
    %v1130 = vld [vmem:[%s29] sm:$0xff]
    %v1131 = vld [vmem:[%s29 + $0x8] sm:$0xf]
    %v1132 = vpack.c.bf16 %v1131, %v1130
    %v1133 = vld [vmem:[%s31] sm:$0x7]
    %v1134 = vpack.c.bf16 %v1133, %v1133
    %v1136 = vand.u32 %v1134, %v972
    %1138 = vmatprep.subr.bf16.mxu0 0
    %1139 = vmatpush1.bf16.msra.mxu0 0
    %1140 = vmatprep.subr.bf16.mxu0 0
    %1141 = vmatpush1.bf16.msra.mxu0 0
    %1142 = vmatprep.subr.bf16.mxu0 0
    %1143 = vmatpush1.bf16.msra.mxu0 0
    %1144 = vmatprep.subr.bf16.mxu0 0
    %1145 = vmatpush1.bf16.msra.mxu0 0
    %1146 = vmatprep.subr.bf16.mxu0 0
    %1147 = vmatpush1.bf16.msra.mxu0 0
    %1148 = vmatprep.subr.bf16.mxu0 0
    %1149 = vmatpush1.bf16.msra.mxu0 0
    %1150 = vmatprep.subr.bf16.mxu0 0
    %1151 = vmatpush1.bf16.msra.mxu0 0
    %1152 = vmatprep.subr.bf16.mxu0 0
    %1153 = vmatpush1.bf16.msra.mxu0 %v1136
    %1154 = vmatprep.subr.bf16.mxu0 0
    %1155 = vmatpush2.bf16.msra.mxu0 0
    %1156 = vmatprep.subr.bf16.mxu0 0
    %1157 = vmatpush2.bf16.msra.mxu0 0
    %1158 = vmatprep.subr.bf16.mxu0 0
    %1159 = vmatpush2.bf16.msra.mxu0 0
    %1160 = vmatprep.subr.bf16.mxu0 0
    %1161 = vmatpush2.bf16.msra.mxu0 0
    %1162 = vmatprep.subr.bf16.mxu0 0
    %1163 = vmatpush2.bf16.msra.mxu0 0
    %1164 = vmatprep.subr.bf16.mxu0 0
    %1165 = vmatpush2.bf16.msra.mxu0 0
    %1166 = vmatprep.subr.bf16.mxu0 0
    %1167 = vmatpush2.bf16.msra.mxu0 0
    %1168 = vmatprep.subr.bf16.mxu0 0
    %1169 = vmatpush2.bf16.msra.mxu0 0
    %1170 = vmatprep.mubr.bf16.mxu0 0
    %1171 = vmatmul.mubr.bf16.gmra.mxu0 %v967
    %v1172 = vpop.f32.mrf.mxu0
    %v1173 = vadd.f32 0.0, %v1172
    %v1174 = vpop.f32.mrf.mxu0
    %v1175 = vpop.f32.mrf.mxu0
    %v1176 = vpop.f32.mrf.mxu0
    %1177 = vdwg.mxu0
    %v1179 = vsel %vm1020, %v1132, 0
    %1181 = vmatprep.subr.bf16.mxu0 0
    %1182 = vmatpush1.bf16.msra.mxu0 0
    %1183 = vmatprep.subr.bf16.mxu0 0
    %1184 = vmatpush1.bf16.msra.mxu0 0
    %1185 = vmatprep.subr.bf16.mxu0 0
    %1186 = vmatpush1.bf16.msra.mxu0 0
    %1187 = vmatprep.subr.bf16.mxu0 0
    %1188 = vmatpush1.bf16.msra.mxu0 0
    %1189 = vmatprep.subr.bf16.mxu0 0
    %1190 = vmatpush1.bf16.msra.mxu0 0
    %1191 = vmatprep.subr.bf16.mxu0 0
    %1192 = vmatpush1.bf16.msra.mxu0 0
    %1193 = vmatprep.subr.bf16.mxu0 0
    %1194 = vmatpush1.bf16.msra.mxu0 0
    %1195 = vmatprep.subr.bf16.mxu0 0
    %1196 = vmatpush1.bf16.msra.mxu0 %v1179
    %1197 = vmatprep.subr.bf16.mxu0 0
    %1198 = vmatpush2.bf16.msra.mxu0 0
    %1199 = vmatprep.subr.bf16.mxu0 0
    %1200 = vmatpush2.bf16.msra.mxu0 0
    %1201 = vmatprep.subr.bf16.mxu0 0
    %1202 = vmatpush2.bf16.msra.mxu0 0
    %1203 = vmatprep.subr.bf16.mxu0 0
    %1204 = vmatpush2.bf16.msra.mxu0 0
    %1205 = vmatprep.subr.bf16.mxu0 0
    %1206 = vmatpush2.bf16.msra.mxu0 0
    %1207 = vmatprep.subr.bf16.mxu0 0
    %1208 = vmatpush2.bf16.msra.mxu0 0
    %1209 = vmatprep.subr.bf16.mxu0 0
    %1210 = vmatpush2.bf16.msra.mxu0 0
    %1211 = vmatprep.subr.bf16.mxu0 0
    %1212 = vmatpush2.bf16.msra.mxu0 0
    %1213 = vmatprep.mubr.bf16.mxu0 0
    %1214 = vmatmul.mubr.bf16.gmra.mxu0 %v1018
    %v1215 = vpop.f32.mrf.mxu0
    %v1216 = vadd.f32 %v1173, %v1215
    %v1217 = vpop.f32.mrf.mxu0
    %v1218 = vpop.f32.mrf.mxu0
    %v1219 = vpop.f32.mrf.mxu0
    %1220 = vdwg.mxu0
    %v1221 = vld [vmem:[%s33] sm:$0x1]
    %v1223 = vlaneseq
    %v1224 = vshrl.u32 %v1223, 7
    %v1225 = vsub.s32 0, %v1224
    %v1226 = vrot.slane %v1221, %v1225
    %v1228 = vadd.f32 %v1216, %v1226
    %v1229 = vmax.f32 %v1228, 0.0
    %v1230 = vpack.c.bf16 %v1229, %v1229
    %v1231 = vld [vmem:[%s35] sm:$0xff]
    %v1232 = vld [vmem:[%s35 + $0x8] sm:$0xf]
    %v1233 = vpack.c.bf16 %v1232, %v1231
    %v1234 = vld [vmem:[%s37] sm:$0x1]
    %v1236 = vlaneseq
    %v1237 = vshrl.u32 %v1236, 7
    %v1238 = vsub.s32 0, %v1237
    %v1239 = vrot.slane %v1234, %v1238
    %v1242 = vsel %vm1016, %v1230, 0
    %v1245 = vsel %vm1020, %v1233, 0
    %1247 = vmatprep.subr.bf16.mxu0 0
    %1248 = vmatpush1.bf16.msra.mxu0 0
    %1249 = vmatprep.subr.bf16.mxu0 0
    %1250 = vmatpush1.bf16.msra.mxu0 0
    %1251 = vmatprep.subr.bf16.mxu0 0
    %1252 = vmatpush1.bf16.msra.mxu0 0
    %1253 = vmatprep.subr.bf16.mxu0 0
    %1254 = vmatpush1.bf16.msra.mxu0 0
    %1255 = vmatprep.subr.bf16.mxu0 0
    %1256 = vmatpush1.bf16.msra.mxu0 0
    %1257 = vmatprep.subr.bf16.mxu0 0
    %1258 = vmatpush1.bf16.msra.mxu0 0
    %1259 = vmatprep.subr.bf16.mxu0 0
    %1260 = vmatpush1.bf16.msra.mxu0 0
    %1261 = vmatprep.subr.bf16.mxu0 0
    %1262 = vmatpush1.bf16.msra.mxu0 %v1245
    %1263 = vmatprep.subr.bf16.mxu0 0
    %1264 = vmatpush2.bf16.msra.mxu0 0
    %1265 = vmatprep.subr.bf16.mxu0 0
    %1266 = vmatpush2.bf16.msra.mxu0 0
    %1267 = vmatprep.subr.bf16.mxu0 0
    %1268 = vmatpush2.bf16.msra.mxu0 0
    %1269 = vmatprep.subr.bf16.mxu0 0
    %1270 = vmatpush2.bf16.msra.mxu0 0
    %1271 = vmatprep.subr.bf16.mxu0 0
    %1272 = vmatpush2.bf16.msra.mxu0 0
    %1273 = vmatprep.subr.bf16.mxu0 0
    %1274 = vmatpush2.bf16.msra.mxu0 0
    %1275 = vmatprep.subr.bf16.mxu0 0
    %1276 = vmatpush2.bf16.msra.mxu0 0
    %1277 = vmatprep.subr.bf16.mxu0 0
    %1278 = vmatpush2.bf16.msra.mxu0 0
    %1279 = vmatprep.mubr.bf16.mxu0 0
    %1280 = vmatmul.mubr.bf16.gmra.mxu0 %v1242
    %v1281 = vpop.f32.mrf.mxu0
    %v1282 = vadd.f32 %v1239, %v1281
    %v1283 = vpop.f32.mrf.mxu0
    %v1284 = vpop.f32.mrf.mxu0
    %v1285 = vpop.f32.mrf.mxu0
    %1286 = vdwg.mxu0
    %v1287 = vmul.f32 %v1125, 1.442695
    %v1288 = vpow.pop %v1287
    %v1289 = vmul.f32 %v957, %v1288
    %v1290 = vadd.f32 %v1282, %v1289
    %v1291 = vld [vmem:[%s39] sm:$0xff]
    %v1292 = vld [vmem:[%s39 + $0x8] sm:$0xf]
    %v1293 = vpack.c.bf16 %v1292, %v1291
    %v1294 = vpack.c.bf16 %v1290, %v1290
    %v1295 = vld [vmem:[%s41] sm:$0x7]
    %v1296 = vpack.c.bf16 %v1295, %v1295
    %v1298 = vsel %vm965, %v1294, 0
    %v1301 = vand.u32 %v1296, %v972
    %1303 = vmatprep.subr.bf16.mxu0 0
    %1304 = vmatpush1.bf16.msra.mxu0 0
    %1305 = vmatprep.subr.bf16.mxu0 0
    %1306 = vmatpush1.bf16.msra.mxu0 0
    %1307 = vmatprep.subr.bf16.mxu0 0
    %1308 = vmatpush1.bf16.msra.mxu0 0
    %1309 = vmatprep.subr.bf16.mxu0 0
    %1310 = vmatpush1.bf16.msra.mxu0 0
    %1311 = vmatprep.subr.bf16.mxu0 0
    %1312 = vmatpush1.bf16.msra.mxu0 0
    %1313 = vmatprep.subr.bf16.mxu0 0
    %1314 = vmatpush1.bf16.msra.mxu0 0
    %1315 = vmatprep.subr.bf16.mxu0 0
    %1316 = vmatpush1.bf16.msra.mxu0 0
    %1317 = vmatprep.subr.bf16.mxu0 0
    %1318 = vmatpush1.bf16.msra.mxu0 %v1301
    %1319 = vmatprep.subr.bf16.mxu0 0
    %1320 = vmatpush2.bf16.msra.mxu0 0
    %1321 = vmatprep.subr.bf16.mxu0 0
    %1322 = vmatpush2.bf16.msra.mxu0 0
    %1323 = vmatprep.subr.bf16.mxu0 0
    %1324 = vmatpush2.bf16.msra.mxu0 0
    %1325 = vmatprep.subr.bf16.mxu0 0
    %1326 = vmatpush2.bf16.msra.mxu0 0
    %1327 = vmatprep.subr.bf16.mxu0 0
    %1328 = vmatpush2.bf16.msra.mxu0 0
    %1329 = vmatprep.subr.bf16.mxu0 0
    %1330 = vmatpush2.bf16.msra.mxu0 0
    %1331 = vmatprep.subr.bf16.mxu0 0
    %1332 = vmatpush2.bf16.msra.mxu0 0
    %1333 = vmatprep.subr.bf16.mxu0 0
    %1334 = vmatpush2.bf16.msra.mxu0 0
    %1335 = vmatprep.mubr.bf16.mxu0 0
    %1336 = vmatmul.mubr.bf16.gmra.mxu0 %v1298
    %v1337 = vpop.f32.mrf.mxu0
    %v1338 = vadd.f32 0.0, %v1337
    %v1339 = vpop.f32.mrf.mxu0
    %v1340 = vpop.f32.mrf.mxu0
    %v1341 = vpop.f32.mrf.mxu0
    %1342 = vdwg.mxu0
    %v1344 = vsel %vm1020, %v1293, 0
    %1346 = vmatprep.subr.bf16.mxu0 0
    %1347 = vmatpush1.bf16.msra.mxu0 0
    %1348 = vmatprep.subr.bf16.mxu0 0
    %1349 = vmatpush1.bf16.msra.mxu0 0
    %1350 = vmatprep.subr.bf16.mxu0 0
    %1351 = vmatpush1.bf16.msra.mxu0 0
    %1352 = vmatprep.subr.bf16.mxu0 0
    %1353 = vmatpush1.bf16.msra.mxu0 0
    %1354 = vmatprep.subr.bf16.mxu0 0
    %1355 = vmatpush1.bf16.msra.mxu0 0
    %1356 = vmatprep.subr.bf16.mxu0 0
    %1357 = vmatpush1.bf16.msra.mxu0 0
    %1358 = vmatprep.subr.bf16.mxu0 0
    %1359 = vmatpush1.bf16.msra.mxu0 0
    %1360 = vmatprep.subr.bf16.mxu0 0
    %1361 = vmatpush1.bf16.msra.mxu0 %v1344
    %1362 = vmatprep.subr.bf16.mxu0 0
    %1363 = vmatpush2.bf16.msra.mxu0 0
    %1364 = vmatprep.subr.bf16.mxu0 0
    %1365 = vmatpush2.bf16.msra.mxu0 0
    %1366 = vmatprep.subr.bf16.mxu0 0
    %1367 = vmatpush2.bf16.msra.mxu0 0
    %1368 = vmatprep.subr.bf16.mxu0 0
    %1369 = vmatpush2.bf16.msra.mxu0 0
    %1370 = vmatprep.subr.bf16.mxu0 0
    %1371 = vmatpush2.bf16.msra.mxu0 0
    %1372 = vmatprep.subr.bf16.mxu0 0
    %1373 = vmatpush2.bf16.msra.mxu0 0
    %1374 = vmatprep.subr.bf16.mxu0 0
    %1375 = vmatpush2.bf16.msra.mxu0 0
    %1376 = vmatprep.subr.bf16.mxu0 0
    %1377 = vmatpush2.bf16.msra.mxu0 0
    %1378 = vmatprep.mubr.bf16.mxu0 0
    %1379 = vmatmul.mubr.bf16.gmra.mxu0 %v1018
    %v1380 = vpop.f32.mrf.mxu0
    %v1381 = vadd.f32 %v1338, %v1380
    %v1382 = vpop.f32.mrf.mxu0
    %v1383 = vpop.f32.mrf.mxu0
    %v1384 = vpop.f32.mrf.mxu0
    %1385 = vdwg.mxu0
    %v1386 = vld [vmem:[%s43] sm:$0x1]
    %v1388 = vlaneseq
    %v1389 = vshrl.u32 %v1388, 7
    %v1390 = vsub.s32 0, %v1389
    %v1391 = vrot.slane %v1386, %v1390
    %v1393 = vadd.f32 %v1381, %v1391
    %v1394 = vmax.f32 %v1393, 0.0
    %v1395 = vpack.c.bf16 %v1394, %v1394
    %v1396 = vld [vmem:[%s45] sm:$0xff]
    %v1397 = vld [vmem:[%s45 + $0x8] sm:$0xf]
    %v1398 = vpack.c.bf16 %v1397, %v1396
    %v1399 = vld [vmem:[%s47] sm:$0x1]
    %v1401 = vlaneseq
    %v1402 = vshrl.u32 %v1401, 7
    %v1403 = vsub.s32 0, %v1402
    %v1404 = vrot.slane %v1399, %v1403
    %v1407 = vsel %vm1016, %v1395, 0
    %v1410 = vsel %vm1020, %v1398, 0
    %1412 = vmatprep.subr.bf16.mxu0 0
    %1413 = vmatpush1.bf16.msra.mxu0 0
    %1414 = vmatprep.subr.bf16.mxu0 0
    %1415 = vmatpush1.bf16.msra.mxu0 0
    %1416 = vmatprep.subr.bf16.mxu0 0
    %1417 = vmatpush1.bf16.msra.mxu0 0
    %1418 = vmatprep.subr.bf16.mxu0 0
    %1419 = vmatpush1.bf16.msra.mxu0 0
    %1420 = vmatprep.subr.bf16.mxu0 0
    %1421 = vmatpush1.bf16.msra.mxu0 0
    %1422 = vmatprep.subr.bf16.mxu0 0
    %1423 = vmatpush1.bf16.msra.mxu0 0
    %1424 = vmatprep.subr.bf16.mxu0 0
    %1425 = vmatpush1.bf16.msra.mxu0 0
    %1426 = vmatprep.subr.bf16.mxu0 0
    %1427 = vmatpush1.bf16.msra.mxu0 %v1410
    %1428 = vmatprep.subr.bf16.mxu0 0
    %1429 = vmatpush2.bf16.msra.mxu0 0
    %1430 = vmatprep.subr.bf16.mxu0 0
    %1431 = vmatpush2.bf16.msra.mxu0 0
    %1432 = vmatprep.subr.bf16.mxu0 0
    %1433 = vmatpush2.bf16.msra.mxu0 0
    %1434 = vmatprep.subr.bf16.mxu0 0
    %1435 = vmatpush2.bf16.msra.mxu0 0
    %1436 = vmatprep.subr.bf16.mxu0 0
    %1437 = vmatpush2.bf16.msra.mxu0 0
    %1438 = vmatprep.subr.bf16.mxu0 0
    %1439 = vmatpush2.bf16.msra.mxu0 0
    %1440 = vmatprep.subr.bf16.mxu0 0
    %1441 = vmatpush2.bf16.msra.mxu0 0
    %1442 = vmatprep.subr.bf16.mxu0 0
    %1443 = vmatpush2.bf16.msra.mxu0 0
    %1444 = vmatprep.mubr.bf16.mxu0 0
    %1445 = vmatmul.mubr.bf16.gmra.mxu0 %v1407
    %v1446 = vpop.f32.mrf.mxu0
    %v1447 = vadd.f32 %v1404, %v1446
    %v1448 = vpop.f32.mrf.mxu0
    %v1449 = vpop.f32.mrf.mxu0
    %v1450 = vpop.f32.mrf.mxu0
    %1451 = vdwg.mxu0
    %v1452 = vld [vmem:[%s49] sm:$0xff]
    %v1453 = vld [vmem:[%s49 + $0x8] sm:$0xf]
    %v1454 = vpack.c.bf16 %v1453, %v1452
    %v1455 = vld [vmem:[%s51] sm:$0x7]
    %v1456 = vpack.c.bf16 %v1455, %v1455
    %v1458 = vand.u32 %v1456, %v972
    %1460 = vmatprep.subr.bf16.mxu0 0
    %1461 = vmatpush1.bf16.msra.mxu0 0
    %1462 = vmatprep.subr.bf16.mxu0 0
    %1463 = vmatpush1.bf16.msra.mxu0 0
    %1464 = vmatprep.subr.bf16.mxu0 0
    %1465 = vmatpush1.bf16.msra.mxu0 0
    %1466 = vmatprep.subr.bf16.mxu0 0
    %1467 = vmatpush1.bf16.msra.mxu0 0
    %1468 = vmatprep.subr.bf16.mxu0 0
    %1469 = vmatpush1.bf16.msra.mxu0 0
    %1470 = vmatprep.subr.bf16.mxu0 0
    %1471 = vmatpush1.bf16.msra.mxu0 0
    %1472 = vmatprep.subr.bf16.mxu0 0
    %1473 = vmatpush1.bf16.msra.mxu0 0
    %1474 = vmatprep.subr.bf16.mxu0 0
    %1475 = vmatpush1.bf16.msra.mxu0 %v1458
    %1476 = vmatprep.subr.bf16.mxu0 0
    %1477 = vmatpush2.bf16.msra.mxu0 0
    %1478 = vmatprep.subr.bf16.mxu0 0
    %1479 = vmatpush2.bf16.msra.mxu0 0
    %1480 = vmatprep.subr.bf16.mxu0 0
    %1481 = vmatpush2.bf16.msra.mxu0 0
    %1482 = vmatprep.subr.bf16.mxu0 0
    %1483 = vmatpush2.bf16.msra.mxu0 0
    %1484 = vmatprep.subr.bf16.mxu0 0
    %1485 = vmatpush2.bf16.msra.mxu0 0
    %1486 = vmatprep.subr.bf16.mxu0 0
    %1487 = vmatpush2.bf16.msra.mxu0 0
    %1488 = vmatprep.subr.bf16.mxu0 0
    %1489 = vmatpush2.bf16.msra.mxu0 0
    %1490 = vmatprep.subr.bf16.mxu0 0
    %1491 = vmatpush2.bf16.msra.mxu0 0
    %1492 = vmatprep.mubr.bf16.mxu0 0
    %1493 = vmatmul.mubr.bf16.gmra.mxu0 %v1298
    %v1494 = vpop.f32.mrf.mxu0
    %v1495 = vadd.f32 0.0, %v1494
    %v1496 = vpop.f32.mrf.mxu0
    %v1497 = vpop.f32.mrf.mxu0
    %v1498 = vpop.f32.mrf.mxu0
    %1499 = vdwg.mxu0
    %v1501 = vsel %vm1020, %v1454, 0
    %1503 = vmatprep.subr.bf16.mxu0 0
    %1504 = vmatpush1.bf16.msra.mxu0 0
    %1505 = vmatprep.subr.bf16.mxu0 0
    %1506 = vmatpush1.bf16.msra.mxu0 0
    %1507 = vmatprep.subr.bf16.mxu0 0
    %1508 = vmatpush1.bf16.msra.mxu0 0
    %1509 = vmatprep.subr.bf16.mxu0 0
    %1510 = vmatpush1.bf16.msra.mxu0 0
    %1511 = vmatprep.subr.bf16.mxu0 0
    %1512 = vmatpush1.bf16.msra.mxu0 0
    %1513 = vmatprep.subr.bf16.mxu0 0
    %1514 = vmatpush1.bf16.msra.mxu0 0
    %1515 = vmatprep.subr.bf16.mxu0 0
    %1516 = vmatpush1.bf16.msra.mxu0 0
    %1517 = vmatprep.subr.bf16.mxu0 0
    %1518 = vmatpush1.bf16.msra.mxu0 %v1501
    %1519 = vmatprep.subr.bf16.mxu0 0
    %1520 = vmatpush2.bf16.msra.mxu0 0
    %1521 = vmatprep.subr.bf16.mxu0 0
    %1522 = vmatpush2.bf16.msra.mxu0 0
    %1523 = vmatprep.subr.bf16.mxu0 0
    %1524 = vmatpush2.bf16.msra.mxu0 0
    %1525 = vmatprep.subr.bf16.mxu0 0
    %1526 = vmatpush2.bf16.msra.mxu0 0
    %1527 = vmatprep.subr.bf16.mxu0 0
    %1528 = vmatpush2.bf16.msra.mxu0 0
    %1529 = vmatprep.subr.bf16.mxu0 0
    %1530 = vmatpush2.bf16.msra.mxu0 0
    %1531 = vmatprep.subr.bf16.mxu0 0
    %1532 = vmatpush2.bf16.msra.mxu0 0
    %1533 = vmatprep.subr.bf16.mxu0 0
    %1534 = vmatpush2.bf16.msra.mxu0 0
    %1535 = vmatprep.mubr.bf16.mxu0 0
    %1536 = vmatmul.mubr.bf16.gmra.mxu0 %v1018
    %v1537 = vpop.f32.mrf.mxu0
    %v1538 = vadd.f32 %v1495, %v1537
    %v1539 = vpop.f32.mrf.mxu0
    %v1540 = vpop.f32.mrf.mxu0
    %v1541 = vpop.f32.mrf.mxu0
    %1542 = vdwg.mxu0
    %v1543 = vld [vmem:[%s53] sm:$0x1]
    %v1545 = vlaneseq
    %v1546 = vshrl.u32 %v1545, 7
    %v1547 = vsub.s32 0, %v1546
    %v1548 = vrot.slane %v1543, %v1547
    %v1550 = vadd.f32 %v1538, %v1548
    %v1551 = vmax.f32 %v1550, 0.0
    %v1552 = vpack.c.bf16 %v1551, %v1551
    %v1553 = vld [vmem:[%s55] sm:$0xff]
    %v1554 = vld [vmem:[%s55 + $0x8] sm:$0xf]
    %v1555 = vpack.c.bf16 %v1554, %v1553
    %v1556 = vld [vmem:[%s57] sm:$0x1]
    %v1558 = vlaneseq
    %v1559 = vshrl.u32 %v1558, 7
    %v1560 = vsub.s32 0, %v1559
    %v1561 = vrot.slane %v1556, %v1560
    %v1564 = vsel %vm1016, %v1552, 0
    %v1567 = vsel %vm1020, %v1555, 0
    %1569 = vmatprep.subr.bf16.mxu0 0
    %1570 = vmatpush1.bf16.msra.mxu0 0
    %1571 = vmatprep.subr.bf16.mxu0 0
    %1572 = vmatpush1.bf16.msra.mxu0 0
    %1573 = vmatprep.subr.bf16.mxu0 0
    %1574 = vmatpush1.bf16.msra.mxu0 0
    %1575 = vmatprep.subr.bf16.mxu0 0
    %1576 = vmatpush1.bf16.msra.mxu0 0
    %1577 = vmatprep.subr.bf16.mxu0 0
    %1578 = vmatpush1.bf16.msra.mxu0 0
    %1579 = vmatprep.subr.bf16.mxu0 0
    %1580 = vmatpush1.bf16.msra.mxu0 0
    %1581 = vmatprep.subr.bf16.mxu0 0
    %1582 = vmatpush1.bf16.msra.mxu0 0
    %1583 = vmatprep.subr.bf16.mxu0 0
    %1584 = vmatpush1.bf16.msra.mxu0 %v1567
    %1585 = vmatprep.subr.bf16.mxu0 0
    %1586 = vmatpush2.bf16.msra.mxu0 0
    %1587 = vmatprep.subr.bf16.mxu0 0
    %1588 = vmatpush2.bf16.msra.mxu0 0
    %1589 = vmatprep.subr.bf16.mxu0 0
    %1590 = vmatpush2.bf16.msra.mxu0 0
    %1591 = vmatprep.subr.bf16.mxu0 0
    %1592 = vmatpush2.bf16.msra.mxu0 0
    %1593 = vmatprep.subr.bf16.mxu0 0
    %1594 = vmatpush2.bf16.msra.mxu0 0
    %1595 = vmatprep.subr.bf16.mxu0 0
    %1596 = vmatpush2.bf16.msra.mxu0 0
    %1597 = vmatprep.subr.bf16.mxu0 0
    %1598 = vmatpush2.bf16.msra.mxu0 0
    %1599 = vmatprep.subr.bf16.mxu0 0
    %1600 = vmatpush2.bf16.msra.mxu0 0
    %1601 = vmatprep.mubr.bf16.mxu0 0
    %1602 = vmatmul.mubr.bf16.gmra.mxu0 %v1564
    %v1603 = vpop.f32.mrf.mxu0
    %v1604 = vadd.f32 %v1561, %v1603
    %v1605 = vpop.f32.mrf.mxu0
    %v1606 = vpop.f32.mrf.mxu0
    %v1607 = vpop.f32.mrf.mxu0
    %1608 = vdwg.mxu0
    %v1609 = vmul.f32 %v1447, 1.442695
    %v1610 = vpow.pop %v1609
    %v1611 = vmul.f32 %v956, %v1610
    %v1612 = vadd.f32 %v1604, %v1611
    %1613 = vst [vmem:[#allocation2] sm:$0xff] 0.0
    %v1614 = vsub.f32 0.0, %v1612
    %v1615 = vmul.f32 %v1614, 1.442695
    %v1616 = vpow.pop %v1615
    %v1617 = vadd.f32 %v1616, 1.0
    %v1618 = vrcp.pop %v1617
    %v1619 = vmul.f32 1.0, %v1618
    %1620 = vst.msk [vmem:[#allocation2] sm:$0xff] %vm965, %v1619
    %v1621 = vsub.f32 0.0, %v1290
    %v1622 = vmul.f32 %v1621, 1.442695
    %v1623 = vpow.pop %v1622
    %v1624 = vadd.f32 %v1623, 1.0
    %v1625 = vrcp.pop %v1624
    %v1626 = vmul.f32 1.0, %v1625
    %1628 = vrot.lane.b32.xlu0 %v1626, 3
    %v1629 = vpop.permute.xlu0 %1628
    %vm1631 = vcmask 48152
    %1632 = vst.msk [vmem:[#allocation2] sm:$0xff] %vm1631, %v1629
    // Predicated region
    $region118: #{tpu_custom_call.1} parent=1 // pred_check
      _
    $region119: #{tpu_custom_call.1} parent=1 // pred_check_branch
      %1634 = sbr.rel (0) target = $region121
    $region120: #{tpu_custom_call.1} parent=1 // pred_region
      %s1636 = ssub.s32 128, 128
      %1637 = vsyncadd [#allocation3], %s1636
      %s1639 = sshll.u32 [#allocation2], 4
      %s1640 = int_to_ptr.vmem [resolvable:$true] %s1639
      %1642 = dma.vmem_to_hbm [thread:$0]  %s1640, 128, %s59, [#allocation3]
    $region121: #{tpu_custom_call.1} parent=1 // pred_fallthru
      _
    // Predicated region
    $region122: #{tpu_custom_call.1} parent=1 // pred_check
      _
    $region123: #{tpu_custom_call.1} parent=1 // pred_check_branch
      %1644 = sbr.rel (0) target = $region125
    $region124: #{tpu_custom_call.1} parent=1 // pred_region
      %1645 = dma.done [#allocation3], 128
    $region125: #{tpu_custom_call.1} parent=1 // pred_fallthru
      _
    %1646 = vsyncpa [#allocation3], 1

</llo_original>
